<compile_context>
chip_gen: v7x
topology: tpu7x:2x2x1
jax: 0.10.0
libtpu: 0.0.40
codegen_flags: <defaults>
</compile_context>

<pallas_src>
import functools

import jax
import jax.numpy as jnp
from jax import lax
from jax.experimental import pallas as pl
from jax.experimental.pallas import tpu as pltpu


# ----------------------------- Pallas kernel ------------------------------- #
def char_lstm_kernel(x_ref, lens_ref, wih_ref, whhf_ref, whhb_ref, b_ref,
                     out_ref, gx_ref):
    """Fused bidirectional LSTM recurrence over packed (masked) sequences.

    x_ref    : (T*B, E)   time-major flattened embedded chars
    lens_ref : (B, 1)     int32 per-row lengths (trailing padding assumed)
    wih_ref  : (E, 8H)    [Wih_fwd | Wih_bwd], gate order i,f,o,g
    whhf_ref : (H, 4H)    forward  Whh, gate order i,f,o,g
    whhb_ref : (H, 4H)    backward Whh, gate order i,f,o,g
    b_ref    : (1, 8H)    [b_fwd | b_bwd]  (b_ih + b_hh, reordered)
    out_ref  : (B, 2H)    [forward final hidden | backward final hidden]
    gx_ref   : (T*B, 8H)  VMEM scratch: precomputed input projections + bias
    """
    TB, _E = x_ref.shape
    B = out_ref.shape[0]
    T = TB // B
    H = whhf_ref.shape[0]
    G4 = 4 * H

    # ---- Hoisted input projection: one big matmul for both directions,
    # ---- all T steps, bias folded in.  Removes 2*T tiny matmuls from the
    # ---- serial dependency chain.
    gx_ref[...] = (jnp.dot(x_ref[...], wih_ref[...],
                           preferred_element_type=jnp.float32) + b_ref[...])

    lens = lens_ref[...]          # (B, 1) int32
    whh_f = whhf_ref[...]
    whh_b = whhb_ref[...]

    def half_step(gates, h, c, m):
        # Gate order i, f, o, g: one contiguous sigmoid (3H lanes) + one tanh.
        sig = jax.nn.sigmoid(gates[:, :3 * H])
        i = sig[:, :H]
        f = sig[:, H:2 * H]
        o = sig[:, 2 * H:3 * H]
        g = jnp.tanh(gates[:, 3 * H:])
        c_new = f * c + i * g
        h_new = o * jnp.tanh(c_new)
        # Masked update == pack_padded_sequence semantics (trailing padding):
        # padded steps leave (h, c) untouched, so the carry after the loop is
        # the state at step len-1 (forward) / step 0 starting from len-1 (bwd).
        return jnp.where(m, h_new, h), jnp.where(m, c_new, c)

    def body(s, carry):
        hf, cf, hb, cb = carry
        tb = T - 1 - s
        gx_f = gx_ref[pl.ds(pl.multiple_of(s * B, B), B), :]    # (B, 8H)
        gx_b = gx_ref[pl.ds(pl.multiple_of(tb * B, B), B), :]   # (B, 8H)
        m_f = jnp.broadcast_to(lens > s, (B, H))
        m_b = jnp.broadcast_to(lens > tb, (B, H))
        gates_f = gx_f[:, :G4] + jnp.dot(hf, whh_f,
                                         preferred_element_type=jnp.float32)
        gates_b = gx_b[:, G4:] + jnp.dot(hb, whh_b,
                                         preferred_element_type=jnp.float32)
        hf, cf = half_step(gates_f, hf, cf, m_f)
        hb, cb = half_step(gates_b, hb, cb, m_b)
        return hf, cf, hb, cb

    z = jnp.zeros((B, H), jnp.float32)
    hf, _cf, hb, _cb = lax.fori_loop(0, T, body, (z, z, z, z), unroll=True)

    out_ref[:, :H] = hf
    out_ref[:, H:] = hb


# ------------------------------- Wrapper ------------------------------------ #
@functools.partial(jax.jit, static_argnames=("hidden",))
def char_lstm_forward(x_ids, embed,
                      w_ih_f, w_hh_f, b_ih_f, b_hh_f,
                      w_ih_b, w_hh_b, b_ih_b, b_hh_b,
                      *, hidden):
    """x_ids: (B, T) int32 char ids (0 = pad, trailing).  Returns (B, 2*hidden).

    Takes PyTorch-layout LSTM parameters (W_ih (4H,E), W_hh (4H,H), biases (4H,)
    in gate order i,f,g,o); all reordering/transposing happens here (one-time
    wrapper cost, not on the kernel's critical path).
    """
    B, T = x_ids.shape
    E = embed.shape[1]
    H = hidden

    # Gate reorder i,f,g,o -> i,f,o,g so sigmoid gates are contiguous in-kernel.
    perm = jnp.concatenate([jnp.arange(2 * H),
                            jnp.arange(3 * H, 4 * H),
                            jnp.arange(2 * H, 3 * H)])

    def prep(w_ih, w_hh, b_ih, b_hh):
        wih = w_ih.T[:, perm]                  # (E, 4H)
        whh = w_hh.T[:, perm]                  # (H, 4H)
        b = (b_ih + b_hh)[perm][None, :]       # (1, 4H)
        return wih, whh, b

    wih_f, whh_f, b_f = prep(w_ih_f, w_hh_f, b_ih_f, b_hh_f)
    wih_b, whh_b, b_b = prep(w_ih_b, w_hh_b, b_ih_b, b_hh_b)
    wih_all = jnp.concatenate([wih_f, wih_b], axis=1)   # (E, 8H)
    b_all = jnp.concatenate([b_f, b_b], axis=1)         # (1, 8H)

    # Glue: embedding gather + layout transpose stay in plain JAX.
    lens = jnp.sum((x_ids > 0).astype(jnp.int32), axis=1)[:, None]   # (B, 1)
    x_emb = jnp.take(embed, x_ids, axis=0)                           # (B, T, E)
    x_flat = jnp.transpose(x_emb, (1, 0, 2)).reshape(T * B, E)       # time-major

    out = pl.pallas_call(
        char_lstm_kernel,
        out_shape=jax.ShapeDtypeStruct((B, 2 * H), jnp.float32),
        grid_spec=pltpu.PrefetchScalarGridSpec(
            num_scalar_prefetch=0,
            grid=(1,),
            in_specs=[
                pl.BlockSpec((T * B, E), lambda i: (0, 0)),
                pl.BlockSpec((B, 1), lambda i: (0, 0)),
                pl.BlockSpec((E, 8 * H), lambda i: (0, 0)),
                pl.BlockSpec((H, 4 * H), lambda i: (0, 0)),
                pl.BlockSpec((H, 4 * H), lambda i: (0, 0)),
                pl.BlockSpec((1, 8 * H), lambda i: (0, 0)),
            ],
            out_specs=pl.BlockSpec((B, 2 * H), lambda i: (0, 0)),
            scratch_shapes=[pltpu.VMEM((T * B, 8 * H), jnp.float32)],
        ),
        compiler_params=pltpu.CompilerParams(
            dimension_semantics=("arbitrary",)),
    )(x_flat, lens, wih_all, whh_f, whh_b, b_all)
    return out


# --------------------------- Pure-JAX reference ------------------------------ #
def ref_forward(x_ids, embed,
                w_ih_f, w_hh_f, b_ih_f, b_hh_f,
                w_ih_b, w_hh_b, b_ih_b, b_hh_b, H):
    mask = (x_ids > 0).astype(jnp.float32)
    x_emb = jnp.take(embed, x_ids, axis=0)
    B = x_ids.shape[0]

    def make_step(w_ih, w_hh, b):
        def step(carry, inp):
            h, c = carry
            x_t, m = inp
            gates = x_t @ w_ih.T + h @ w_hh.T + b
            i = jax.nn.sigmoid(gates[:, :H])
            f = jax.nn.sigmoid(gates[:, H:2 * H])
            g = jnp.tanh(gates[:, 2 * H:3 * H])
            o = jax.nn.sigmoid(gates[:, 3 * H:])
            c_new = f * c + i * g
            h_new = o * jnp.tanh(c_new)
            m = m[:, None]
            return (m * h_new + (1 - m) * h, m * c_new + (1 - m) * c), None
        return step

    h0 = jnp.zeros((B, H), jnp.float32)
    c0 = jnp.zeros((B, H), jnp.float32)
    x_tbe = jnp.transpose(x_emb, (1, 0, 2))
    m_tb = jnp.transpose(mask, (1, 0))
    (hf, _), _ = lax.scan(make_step(w_ih_f, w_hh_f, b_ih_f + b_hh_f),
                          (h0, c0), (x_tbe, m_tb))
    (hb, _), _ = lax.scan(make_step(w_ih_b, w_hh_b, b_ih_b + b_hh_b),
                          (h0, c0), (x_tbe[::-1], m_tb[::-1]))
    return jnp.concatenate([hf, hb], axis=1)


# --------------------------------- Main -------------------------------------- #
if __name__ == "__main__":
    # Module hyper-params (small, consistent with CharLSTM.__init__).
    n_char, n_embed, n_out = 20, 16, 32
    H = n_out // 2
    B, T = 8, 8

    key = jax.random.PRNGKey(0)
    ks = jax.random.split(key, 10)

    # Embedding: uniform(-sqrt(3/n_embed), sqrt(3/n_embed))  (reset_parameters).
    emb_bound = (3.0 / n_embed) ** 0.5
    embed = jax.random.uniform(ks[0], (n_char, n_embed), jnp.float32,
                               -emb_bound, emb_bound)

    # LSTM params: PyTorch default uniform(-1/sqrt(H), 1/sqrt(H)), gates i,f,g,o.
    lb = 1.0 / (H ** 0.5)
    u = lambda k, s: jax.random.uniform(k, s, jnp.float32, -lb, lb)
    w_ih_f, w_hh_f = u(ks[1], (4 * H, n_embed)), u(ks[2], (4 * H, H))
    b_ih_f, b_hh_f = u(ks[3], (4 * H,)), u(ks[4], (4 * H,))
    w_ih_b, w_hh_b = u(ks[5], (4 * H, n_embed)), u(ks[6], (4 * H, H))
    b_ih_b, b_hh_b = u(ks[7], (4 * H,)), u(ks[8], (4 * H,))

    # Input char ids: non-zero chars with trailing zero padding, varied lengths.
    lens = jnp.array([8, 5, 3, 8, 1, 6, 7, 2], dtype=jnp.int32)
    chars = jax.random.randint(ks[9], (B, T), 1, n_char, dtype=jnp.int32)
    pos = jnp.arange(T, dtype=jnp.int32)[None, :]
    x_ids = jnp.where(pos < lens[:, None], chars, 0)

    out = char_lstm_forward(x_ids, embed,
                            w_ih_f, w_hh_f, b_ih_f, b_hh_f,
                            w_ih_b, w_hh_b, b_ih_b, b_hh_b, hidden=H)
    out = jax.block_until_ready(out)

    ref = ref_forward(x_ids, embed,
                      w_ih_f, w_hh_f, b_ih_f, b_hh_f,
                      w_ih_b, w_hh_b, b_ih_b, b_hh_b, H)
    assert out.shape == (B, n_out)
    assert jnp.allclose(out, ref, rtol=1e-4, atol=1e-4), "mismatch vs reference"

    print("KERNEL_OK")
</pallas_src>

<mosaic_0001>
module attributes {stable_mosaic.version = 11 : i64} {
  func.func @char_lstm_kernel(%arg0: i32, %arg1: memref<64x16xf32, #tpu.memory_space<vmem>>, %arg2: memref<8x1xi32, #tpu.memory_space<vmem>>, %arg3: memref<16x128xf32, #tpu.memory_space<vmem>>, %arg4: memref<16x64xf32, #tpu.memory_space<vmem>>, %arg5: memref<16x64xf32, #tpu.memory_space<vmem>>, %arg6: memref<1x128xf32, #tpu.memory_space<vmem>>, %arg7: memref<8x32xf32, #tpu.memory_space<vmem>>, %arg8: memref<64x128xf32, #tpu.memory_space<vmem>>) attributes {dimension_semantics = [#tpu.dimension_semantics<arbitrary>], iteration_bounds = array<i64: 1>, scalar_prefetch = 0 : i64, scratch_operands = 1 : i64, tpu.core_type = #tpu.core_type<tc>, window_params = [{pipeline_mode = #tpu.pipeline_mode<synchronous>, transform_indices = @transform_0, window_bounds = array<i64: 64, 16>}, {pipeline_mode = #tpu.pipeline_mode<synchronous>, transform_indices = @transform_1, window_bounds = array<i64: 8, 1>}, {pipeline_mode = #tpu.pipeline_mode<synchronous>, transform_indices = @transform_2, window_bounds = array<i64: 16, 128>}, {pipeline_mode = #tpu.pipeline_mode<synchronous>, transform_indices = @transform_3, window_bounds = array<i64: 16, 64>}, {pipeline_mode = #tpu.pipeline_mode<synchronous>, transform_indices = @transform_4, window_bounds = array<i64: 16, 64>}, {pipeline_mode = #tpu.pipeline_mode<synchronous>, transform_indices = @transform_5, window_bounds = array<i64: 1, 128>}, {pipeline_mode = #tpu.pipeline_mode<synchronous>, transform_indices = @transform_6, window_bounds = array<i64: 8, 32>}]} {
    %c0 = arith.constant 0 : index
    %c0_0 = arith.constant 0 : index
    %0 = vector.load %arg1[%c0, %c0_0] : memref<64x16xf32, #tpu.memory_space<vmem>>, vector<64x16xf32>
    %c0_1 = arith.constant 0 : index
    %c0_2 = arith.constant 0 : index
    %1 = vector.load %arg3[%c0_1, %c0_2] : memref<16x128xf32, #tpu.memory_space<vmem>>, vector<16x128xf32>
    %cst = arith.constant dense<0.000000e+00> : vector<64x128xf32>
    %2 = tpu.matmul %0, %1, %cst {dimension_numbers = #tpu.dot_dimension_numbers<[1], [0], [0], [1], [0, 0, 1, 1], [], []>} : vector<64x16xf32>, vector<16x128xf32>, vector<64x128xf32> -> vector<64x128xf32>
    %c0_3 = arith.constant 0 : index
    %c0_4 = arith.constant 0 : index
    %3 = vector.load %arg6[%c0_3, %c0_4] : memref<1x128xf32, #tpu.memory_space<vmem>>, vector<1x128xf32>
    %4 = vector.broadcast %3 : vector<1x128xf32> to vector<64x128xf32>
    %5 = arith.addf %2, %4 : vector<64x128xf32>
    %c0_5 = arith.constant 0 : index
    %c0_6 = arith.constant 0 : index
    %6 = vector.load %arg8[%c0_5, %c0_6] : memref<64x128xf32, #tpu.memory_space<vmem>>, vector<64x128xf32>
    tpu.vector_store %arg8[%c0_5, %c0_6], %5 {strides = array<i32>} : memref<64x128xf32, #tpu.memory_space<vmem>>, vector<64x128xf32>,
    %c0_7 = arith.constant 0 : index
    %c0_8 = arith.constant 0 : index
    %7 = vector.load %arg2[%c0_7, %c0_8] : memref<8x1xi32, #tpu.memory_space<vmem>>, vector<8x1xi32>
    %c0_9 = arith.constant 0 : index
    %c0_10 = arith.constant 0 : index
    %8 = vector.load %arg4[%c0_9, %c0_10] : memref<16x64xf32, #tpu.memory_space<vmem>>, vector<16x64xf32>
    %c0_11 = arith.constant 0 : index
    %c0_12 = arith.constant 0 : index
    %9 = vector.load %arg5[%c0_11, %c0_12] : memref<16x64xf32, #tpu.memory_space<vmem>>, vector<16x64xf32>
    %cst_13 = arith.constant 0.000000e+00 : f32
    %10 = vector.broadcast %cst_13 : f32 to vector<8x16xf32>
    %c0_i32 = arith.constant 0 : i32
    %c7_i32 = arith.constant 7 : i32
    %11 = arith.subi %c7_i32, %c0_i32 : i32
    %c8_i32 = arith.constant 8 : i32
    %12 = arith.muli %c0_i32, %c8_i32 : i32
    %13 = tpu.assume_multiple %12, 8 : i32
    %14 = arith.index_cast %13 : i32 to index
    %c0_14 = arith.constant 0 : index
    %15 = vector.load %arg8[%14, %c0_14] : memref<64x128xf32, #tpu.memory_space<vmem>>, vector<8x128xf32>
    %c8_i32_15 = arith.constant 8 : i32
    %16 = arith.muli %11, %c8_i32_15 : i32
    %17 = tpu.assume_multiple %16, 8 : i32
    %18 = arith.index_cast %17 : i32 to index
    %c0_16 = arith.constant 0 : index
    %19 = vector.load %arg8[%18, %c0_16] : memref<64x128xf32, #tpu.memory_space<vmem>>, vector<8x128xf32>
    %20 = vector.broadcast %c0_i32 : i32 to vector<8x1xi32>
    %21 = arith.cmpi sgt, %7, %20 : vector<8x1xi32>
    %22 = vector.shape_cast %21 : vector<8x1xi1> to vector<8x1xi1>
    %23 = vector.broadcast %22 : vector<8x1xi1> to vector<8x16xi1>
    %24 = vector.broadcast %11 : i32 to vector<8x1xi32>
    %25 = arith.cmpi sgt, %7, %24 : vector<8x1xi32>
    %26 = vector.shape_cast %25 : vector<8x1xi1> to vector<8x1xi1>
    %27 = vector.broadcast %26 : vector<8x1xi1> to vector<8x16xi1>
    %28 = vector.extract_strided_slice %15 {offsets = [0, 0], sizes = [8, 64], strides = [1, 1]} : vector<8x128xf32> to vector<8x64xf32>
    %cst_17 = arith.constant dense<0.000000e+00> : vector<8x64xf32>
    %29 = tpu.matmul %10, %8, %cst_17 {dimension_numbers = #tpu.dot_dimension_numbers<[1], [0], [0], [1], [0, 0, 1, 1], [], []>} : vector<8x16xf32>, vector<16x64xf32>, vector<8x64xf32> -> vector<8x64xf32>
    %30 = arith.addf %28, %29 : vector<8x64xf32>
    %31 = vector.extract_strided_slice %19 {offsets = [0, 64], sizes = [8, 64], strides = [1, 1]} : vector<8x128xf32> to vector<8x64xf32>
    %cst_18 = arith.constant dense<0.000000e+00> : vector<8x64xf32>
    %32 = tpu.matmul %10, %9, %cst_18 {dimension_numbers = #tpu.dot_dimension_numbers<[1], [0], [0], [1], [0, 0, 1, 1], [], []>} : vector<8x16xf32>, vector<16x64xf32>, vector<8x64xf32> -> vector<8x64xf32>
    %33 = arith.addf %31, %32 : vector<8x64xf32>
    %34 = vector.extract_strided_slice %30 {offsets = [0, 0], sizes = [8, 48], strides = [1, 1]} : vector<8x64xf32> to vector<8x48xf32>
    %35 = arith.negf %34 : vector<8x48xf32>
    %36 = math.exp %35 : vector<8x48xf32>
    %cst_19 = arith.constant 1.000000e+00 : f32
    %37 = vector.broadcast %cst_19 : f32 to vector<8x48xf32>
    %38 = arith.addf %37, %36 : vector<8x48xf32>
    %39 = arith.divf %37, %38 : vector<8x48xf32>
    %40 = vector.extract_strided_slice %39 {offsets = [0, 0], sizes = [8, 16], strides = [1, 1]} : vector<8x48xf32> to vector<8x16xf32>
    %41 = vector.extract_strided_slice %39 {offsets = [0, 16], sizes = [8, 16], strides = [1, 1]} : vector<8x48xf32> to vector<8x16xf32>
    %42 = vector.extract_strided_slice %39 {offsets = [0, 32], sizes = [8, 16], strides = [1, 1]} : vector<8x48xf32> to vector<8x16xf32>
    %43 = vector.extract_strided_slice %30 {offsets = [0, 48], sizes = [8, 16], strides = [1, 1]} : vector<8x64xf32> to vector<8x16xf32>
    %44 = math.tanh %43 : vector<8x16xf32>
    %45 = arith.mulf %41, %10 : vector<8x16xf32>
    %46 = arith.mulf %40, %44 : vector<8x16xf32>
    %47 = arith.addf %45, %46 : vector<8x16xf32>
    %48 = math.tanh %47 : vector<8x16xf32>
    %49 = arith.mulf %42, %48 : vector<8x16xf32>
    %50 = arith.select %23, %49, %10 : vector<8x16xi1>, vector<8x16xf32>
    %51 = arith.select %23, %47, %10 : vector<8x16xi1>, vector<8x16xf32>
    %52 = vector.extract_strided_slice %33 {offsets = [0, 0], sizes = [8, 48], strides = [1, 1]} : vector<8x64xf32> to vector<8x48xf32>
    %53 = arith.negf %52 : vector<8x48xf32>
    %54 = math.exp %53 : vector<8x48xf32>
    %cst_20 = arith.constant 1.000000e+00 : f32
    %55 = vector.broadcast %cst_20 : f32 to vector<8x48xf32>
    %56 = arith.addf %55, %54 : vector<8x48xf32>
    %57 = arith.divf %55, %56 : vector<8x48xf32>
    %58 = vector.extract_strided_slice %57 {offsets = [0, 0], sizes = [8, 16], strides = [1, 1]} : vector<8x48xf32> to vector<8x16xf32>
    %59 = vector.extract_strided_slice %57 {offsets = [0, 16], sizes = [8, 16], strides = [1, 1]} : vector<8x48xf32> to vector<8x16xf32>
    %60 = vector.extract_strided_slice %57 {offsets = [0, 32], sizes = [8, 16], strides = [1, 1]} : vector<8x48xf32> to vector<8x16xf32>
    %61 = vector.extract_strided_slice %33 {offsets = [0, 48], sizes = [8, 16], strides = [1, 1]} : vector<8x64xf32> to vector<8x16xf32>
    %62 = math.tanh %61 : vector<8x16xf32>
    %63 = arith.mulf %59, %10 : vector<8x16xf32>
    %64 = arith.mulf %58, %62 : vector<8x16xf32>
    %65 = arith.addf %63, %64 : vector<8x16xf32>
    %66 = math.tanh %65 : vector<8x16xf32>
    %67 = arith.mulf %60, %66 : vector<8x16xf32>
    %68 = arith.select %27, %67, %10 : vector<8x16xi1>, vector<8x16xf32>
    %69 = arith.select %27, %65, %10 : vector<8x16xi1>, vector<8x16xf32>
    %c1_i32 = arith.constant 1 : i32
    %c7_i32_21 = arith.constant 7 : i32
    %70 = arith.subi %c7_i32_21, %c1_i32 : i32
    %c8_i32_22 = arith.constant 8 : i32
    %71 = arith.muli %c1_i32, %c8_i32_22 : i32
    %72 = tpu.assume_multiple %71, 8 : i32
    %73 = arith.index_cast %72 : i32 to index
    %c0_23 = arith.constant 0 : index
    %74 = vector.load %arg8[%73, %c0_23] : memref<64x128xf32, #tpu.memory_space<vmem>>, vector<8x128xf32>
    %c8_i32_24 = arith.constant 8 : i32
    %75 = arith.muli %70, %c8_i32_24 : i32
    %76 = tpu.assume_multiple %75, 8 : i32
    %77 = arith.index_cast %76 : i32 to index
    %c0_25 = arith.constant 0 : index
    %78 = vector.load %arg8[%77, %c0_25] : memref<64x128xf32, #tpu.memory_space<vmem>>, vector<8x128xf32>
    %79 = vector.broadcast %c1_i32 : i32 to vector<8x1xi32>
    %80 = arith.cmpi sgt, %7, %79 : vector<8x1xi32>
    %81 = vector.shape_cast %80 : vector<8x1xi1> to vector<8x1xi1>
    %82 = vector.broadcast %81 : vector<8x1xi1> to vector<8x16xi1>
    %83 = vector.broadcast %70 : i32 to vector<8x1xi32>
    %84 = arith.cmpi sgt, %7, %83 : vector<8x1xi32>
    %85 = vector.shape_cast %84 : vector<8x1xi1> to vector<8x1xi1>
    %86 = vector.broadcast %85 : vector<8x1xi1> to vector<8x16xi1>
    %87 = vector.extract_strided_slice %74 {offsets = [0, 0], sizes = [8, 64], strides = [1, 1]} : vector<8x128xf32> to vector<8x64xf32>
    %cst_26 = arith.constant dense<0.000000e+00> : vector<8x64xf32>
    %88 = tpu.matmul %50, %8, %cst_26 {dimension_numbers = #tpu.dot_dimension_numbers<[1], [0], [0], [1], [0, 0, 1, 1], [], []>} : vector<8x16xf32>, vector<16x64xf32>, vector<8x64xf32> -> vector<8x64xf32>
    %89 = arith.addf %87, %88 : vector<8x64xf32>
    %90 = vector.extract_strided_slice %78 {offsets = [0, 64], sizes = [8, 64], strides = [1, 1]} : vector<8x128xf32> to vector<8x64xf32>
    %cst_27 = arith.constant dense<0.000000e+00> : vector<8x64xf32>
    %91 = tpu.matmul %68, %9, %cst_27 {dimension_numbers = #tpu.dot_dimension_numbers<[1], [0], [0], [1], [0, 0, 1, 1], [], []>} : vector<8x16xf32>, vector<16x64xf32>, vector<8x64xf32> -> vector<8x64xf32>
    %92 = arith.addf %90, %91 : vector<8x64xf32>
    %93 = vector.extract_strided_slice %89 {offsets = [0, 0], sizes = [8, 48], strides = [1, 1]} : vector<8x64xf32> to vector<8x48xf32>
    %94 = arith.negf %93 : vector<8x48xf32>
    %95 = math.exp %94 : vector<8x48xf32>
    %cst_28 = arith.constant 1.000000e+00 : f32
    %96 = vector.broadcast %cst_28 : f32 to vector<8x48xf32>
    %97 = arith.addf %96, %95 : vector<8x48xf32>
    %98 = arith.divf %96, %97 : vector<8x48xf32>
    %99 = vector.extract_strided_slice %98 {offsets = [0, 0], sizes = [8, 16], strides = [1, 1]} : vector<8x48xf32> to vector<8x16xf32>
    %100 = vector.extract_strided_slice %98 {offsets = [0, 16], sizes = [8, 16], strides = [1, 1]} : vector<8x48xf32> to vector<8x16xf32>
    %101 = vector.extract_strided_slice %98 {offsets = [0, 32], sizes = [8, 16], strides = [1, 1]} : vector<8x48xf32> to vector<8x16xf32>
    %102 = vector.extract_strided_slice %89 {offsets = [0, 48], sizes = [8, 16], strides = [1, 1]} : vector<8x64xf32> to vector<8x16xf32>
    %103 = math.tanh %102 : vector<8x16xf32>
    %104 = arith.mulf %100, %51 : vector<8x16xf32>
    %105 = arith.mulf %99, %103 : vector<8x16xf32>
    %106 = arith.addf %104, %105 : vector<8x16xf32>
    %107 = math.tanh %106 : vector<8x16xf32>
    %108 = arith.mulf %101, %107 : vector<8x16xf32>
    %109 = arith.select %82, %108, %50 : vector<8x16xi1>, vector<8x16xf32>
    %110 = arith.select %82, %106, %51 : vector<8x16xi1>, vector<8x16xf32>
    %111 = vector.extract_strided_slice %92 {offsets = [0, 0], sizes = [8, 48], strides = [1, 1]} : vector<8x64xf32> to vector<8x48xf32>
    %112 = arith.negf %111 : vector<8x48xf32>
    %113 = math.exp %112 : vector<8x48xf32>
    %cst_29 = arith.constant 1.000000e+00 : f32
    %114 = vector.broadcast %cst_29 : f32 to vector<8x48xf32>
    %115 = arith.addf %114, %113 : vector<8x48xf32>
    %116 = arith.divf %114, %115 : vector<8x48xf32>
    %117 = vector.extract_strided_slice %116 {offsets = [0, 0], sizes = [8, 16], strides = [1, 1]} : vector<8x48xf32> to vector<8x16xf32>
    %118 = vector.extract_strided_slice %116 {offsets = [0, 16], sizes = [8, 16], strides = [1, 1]} : vector<8x48xf32> to vector<8x16xf32>
    %119 = vector.extract_strided_slice %116 {offsets = [0, 32], sizes = [8, 16], strides = [1, 1]} : vector<8x48xf32> to vector<8x16xf32>
    %120 = vector.extract_strided_slice %92 {offsets = [0, 48], sizes = [8, 16], strides = [1, 1]} : vector<8x64xf32> to vector<8x16xf32>
    %121 = math.tanh %120 : vector<8x16xf32>
    %122 = arith.mulf %118, %69 : vector<8x16xf32>
    %123 = arith.mulf %117, %121 : vector<8x16xf32>
    %124 = arith.addf %122, %123 : vector<8x16xf32>
    %125 = math.tanh %124 : vector<8x16xf32>
    %126 = arith.mulf %119, %125 : vector<8x16xf32>
    %127 = arith.select %86, %126, %68 : vector<8x16xi1>, vector<8x16xf32>
    %128 = arith.select %86, %124, %69 : vector<8x16xi1>, vector<8x16xf32>
    %c2_i32 = arith.constant 2 : i32
    %c7_i32_30 = arith.constant 7 : i32
    %129 = arith.subi %c7_i32_30, %c2_i32 : i32
    %c8_i32_31 = arith.constant 8 : i32
    %130 = arith.muli %c2_i32, %c8_i32_31 : i32
    %131 = tpu.assume_multiple %130, 8 : i32
    %132 = arith.index_cast %131 : i32 to index
    %c0_32 = arith.constant 0 : index
    %133 = vector.load %arg8[%132, %c0_32] : memref<64x128xf32, #tpu.memory_space<vmem>>, vector<8x128xf32>
    %c8_i32_33 = arith.constant 8 : i32
    %134 = arith.muli %129, %c8_i32_33 : i32
    %135 = tpu.assume_multiple %134, 8 : i32
    %136 = arith.index_cast %135 : i32 to index
    %c0_34 = arith.constant 0 : index
    %137 = vector.load %arg8[%136, %c0_34] : memref<64x128xf32, #tpu.memory_space<vmem>>, vector<8x128xf32>
    %138 = vector.broadcast %c2_i32 : i32 to vector<8x1xi32>
    %139 = arith.cmpi sgt, %7, %138 : vector<8x1xi32>
    %140 = vector.shape_cast %139 : vector<8x1xi1> to vector<8x1xi1>
    %141 = vector.broadcast %140 : vector<8x1xi1> to vector<8x16xi1>
    %142 = vector.broadcast %129 : i32 to vector<8x1xi32>
    %143 = arith.cmpi sgt, %7, %142 : vector<8x1xi32>
    %144 = vector.shape_cast %143 : vector<8x1xi1> to vector<8x1xi1>
    %145 = vector.broadcast %144 : vector<8x1xi1> to vector<8x16xi1>
    %146 = vector.extract_strided_slice %133 {offsets = [0, 0], sizes = [8, 64], strides = [1, 1]} : vector<8x128xf32> to vector<8x64xf32>
    %cst_35 = arith.constant dense<0.000000e+00> : vector<8x64xf32>
    %147 = tpu.matmul %109, %8, %cst_35 {dimension_numbers = #tpu.dot_dimension_numbers<[1], [0], [0], [1], [0, 0, 1, 1], [], []>} : vector<8x16xf32>, vector<16x64xf32>, vector<8x64xf32> -> vector<8x64xf32>
    %148 = arith.addf %146, %147 : vector<8x64xf32>
    %149 = vector.extract_strided_slice %137 {offsets = [0, 64], sizes = [8, 64], strides = [1, 1]} : vector<8x128xf32> to vector<8x64xf32>
    %cst_36 = arith.constant dense<0.000000e+00> : vector<8x64xf32>
    %150 = tpu.matmul %127, %9, %cst_36 {dimension_numbers = #tpu.dot_dimension_numbers<[1], [0], [0], [1], [0, 0, 1, 1], [], []>} : vector<8x16xf32>, vector<16x64xf32>, vector<8x64xf32> -> vector<8x64xf32>
    %151 = arith.addf %149, %150 : vector<8x64xf32>
    %152 = vector.extract_strided_slice %148 {offsets = [0, 0], sizes = [8, 48], strides = [1, 1]} : vector<8x64xf32> to vector<8x48xf32>
    %153 = arith.negf %152 : vector<8x48xf32>
    %154 = math.exp %153 : vector<8x48xf32>
    %cst_37 = arith.constant 1.000000e+00 : f32
    %155 = vector.broadcast %cst_37 : f32 to vector<8x48xf32>
    %156 = arith.addf %155, %154 : vector<8x48xf32>
    %157 = arith.divf %155, %156 : vector<8x48xf32>
    %158 = vector.extract_strided_slice %157 {offsets = [0, 0], sizes = [8, 16], strides = [1, 1]} : vector<8x48xf32> to vector<8x16xf32>
    %159 = vector.extract_strided_slice %157 {offsets = [0, 16], sizes = [8, 16], strides = [1, 1]} : vector<8x48xf32> to vector<8x16xf32>
    %160 = vector.extract_strided_slice %157 {offsets = [0, 32], sizes = [8, 16], strides = [1, 1]} : vector<8x48xf32> to vector<8x16xf32>
    %161 = vector.extract_strided_slice %148 {offsets = [0, 48], sizes = [8, 16], strides = [1, 1]} : vector<8x64xf32> to vector<8x16xf32>
    %162 = math.tanh %161 : vector<8x16xf32>
    %163 = arith.mulf %159, %110 : vector<8x16xf32>
    %164 = arith.mulf %158, %162 : vector<8x16xf32>
    %165 = arith.addf %163, %164 : vector<8x16xf32>
    %166 = math.tanh %165 : vector<8x16xf32>
    %167 = arith.mulf %160, %166 : vector<8x16xf32>
    %168 = arith.select %141, %167, %109 : vector<8x16xi1>, vector<8x16xf32>
    %169 = arith.select %141, %165, %110 : vector<8x16xi1>, vector<8x16xf32>
    %170 = vector.extract_strided_slice %151 {offsets = [0, 0], sizes = [8, 48], strides = [1, 1]} : vector<8x64xf32> to vector<8x48xf32>
    %171 = arith.negf %170 : vector<8x48xf32>
    %172 = math.exp %171 : vector<8x48xf32>
    %cst_38 = arith.constant 1.000000e+00 : f32
    %173 = vector.broadcast %cst_38 : f32 to vector<8x48xf32>
    %174 = arith.addf %173, %172 : vector<8x48xf32>
    %175 = arith.divf %173, %174 : vector<8x48xf32>
    %176 = vector.extract_strided_slice %175 {offsets = [0, 0], sizes = [8, 16], strides = [1, 1]} : vector<8x48xf32> to vector<8x16xf32>
    %177 = vector.extract_strided_slice %175 {offsets = [0, 16], sizes = [8, 16], strides = [1, 1]} : vector<8x48xf32> to vector<8x16xf32>
    %178 = vector.extract_strided_slice %175 {offsets = [0, 32], sizes = [8, 16], strides = [1, 1]} : vector<8x48xf32> to vector<8x16xf32>
    %179 = vector.extract_strided_slice %151 {offsets = [0, 48], sizes = [8, 16], strides = [1, 1]} : vector<8x64xf32> to vector<8x16xf32>
    %180 = math.tanh %179 : vector<8x16xf32>
    %181 = arith.mulf %177, %128 : vector<8x16xf32>
    %182 = arith.mulf %176, %180 : vector<8x16xf32>
    %183 = arith.addf %181, %182 : vector<8x16xf32>
    %184 = math.tanh %183 : vector<8x16xf32>
    %185 = arith.mulf %178, %184 : vector<8x16xf32>
    %186 = arith.select %145, %185, %127 : vector<8x16xi1>, vector<8x16xf32>
    %187 = arith.select %145, %183, %128 : vector<8x16xi1>, vector<8x16xf32>
    %c3_i32 = arith.constant 3 : i32
    %c7_i32_39 = arith.constant 7 : i32
    %188 = arith.subi %c7_i32_39, %c3_i32 : i32
    %c8_i32_40 = arith.constant 8 : i32
    %189 = arith.muli %c3_i32, %c8_i32_40 : i32
    %190 = tpu.assume_multiple %189, 8 : i32
    %191 = arith.index_cast %190 : i32 to index
    %c0_41 = arith.constant 0 : index
    %192 = vector.load %arg8[%191, %c0_41] : memref<64x128xf32, #tpu.memory_space<vmem>>, vector<8x128xf32>
    %c8_i32_42 = arith.constant 8 : i32
    %193 = arith.muli %188, %c8_i32_42 : i32
    %194 = tpu.assume_multiple %193, 8 : i32
    %195 = arith.index_cast %194 : i32 to index
    %c0_43 = arith.constant 0 : index
    %196 = vector.load %arg8[%195, %c0_43] : memref<64x128xf32, #tpu.memory_space<vmem>>, vector<8x128xf32>
    %197 = vector.broadcast %c3_i32 : i32 to vector<8x1xi32>
    %198 = arith.cmpi sgt, %7, %197 : vector<8x1xi32>
    %199 = vector.shape_cast %198 : vector<8x1xi1> to vector<8x1xi1>
    %200 = vector.broadcast %199 : vector<8x1xi1> to vector<8x16xi1>
    %201 = vector.broadcast %188 : i32 to vector<8x1xi32>
    %202 = arith.cmpi sgt, %7, %201 : vector<8x1xi32>
    %203 = vector.shape_cast %202 : vector<8x1xi1> to vector<8x1xi1>
    %204 = vector.broadcast %203 : vector<8x1xi1> to vector<8x16xi1>
    %205 = vector.extract_strided_slice %192 {offsets = [0, 0], sizes = [8, 64], strides = [1, 1]} : vector<8x128xf32> to vector<8x64xf32>
    %cst_44 = arith.constant dense<0.000000e+00> : vector<8x64xf32>
    %206 = tpu.matmul %168, %8, %cst_44 {dimension_numbers = #tpu.dot_dimension_numbers<[1], [0], [0], [1], [0, 0, 1, 1], [], []>} : vector<8x16xf32>, vector<16x64xf32>, vector<8x64xf32> -> vector<8x64xf32>
    %207 = arith.addf %205, %206 : vector<8x64xf32>
    %208 = vector.extract_strided_slice %196 {offsets = [0, 64], sizes = [8, 64], strides = [1, 1]} : vector<8x128xf32> to vector<8x64xf32>
    %cst_45 = arith.constant dense<0.000000e+00> : vector<8x64xf32>
    %209 = tpu.matmul %186, %9, %cst_45 {dimension_numbers = #tpu.dot_dimension_numbers<[1], [0], [0], [1], [0, 0, 1, 1], [], []>} : vector<8x16xf32>, vector<16x64xf32>, vector<8x64xf32> -> vector<8x64xf32>
    %210 = arith.addf %208, %209 : vector<8x64xf32>
    %211 = vector.extract_strided_slice %207 {offsets = [0, 0], sizes = [8, 48], strides = [1, 1]} : vector<8x64xf32> to vector<8x48xf32>
    %212 = arith.negf %211 : vector<8x48xf32>
    %213 = math.exp %212 : vector<8x48xf32>
    %cst_46 = arith.constant 1.000000e+00 : f32
    %214 = vector.broadcast %cst_46 : f32 to vector<8x48xf32>
    %215 = arith.addf %214, %213 : vector<8x48xf32>
    %216 = arith.divf %214, %215 : vector<8x48xf32>
    %217 = vector.extract_strided_slice %216 {offsets = [0, 0], sizes = [8, 16], strides = [1, 1]} : vector<8x48xf32> to vector<8x16xf32>
    %218 = vector.extract_strided_slice %216 {offsets = [0, 16], sizes = [8, 16], strides = [1, 1]} : vector<8x48xf32> to vector<8x16xf32>
    %219 = vector.extract_strided_slice %216 {offsets = [0, 32], sizes = [8, 16], strides = [1, 1]} : vector<8x48xf32> to vector<8x16xf32>
    %220 = vector.extract_strided_slice %207 {offsets = [0, 48], sizes = [8, 16], strides = [1, 1]} : vector<8x64xf32> to vector<8x16xf32>
    %221 = math.tanh %220 : vector<8x16xf32>
    %222 = arith.mulf %218, %169 : vector<8x16xf32>
    %223 = arith.mulf %217, %221 : vector<8x16xf32>
    %224 = arith.addf %222, %223 : vector<8x16xf32>
    %225 = math.tanh %224 : vector<8x16xf32>
    %226 = arith.mulf %219, %225 : vector<8x16xf32>
    %227 = arith.select %200, %226, %168 : vector<8x16xi1>, vector<8x16xf32>
    %228 = arith.select %200, %224, %169 : vector<8x16xi1>, vector<8x16xf32>
    %229 = vector.extract_strided_slice %210 {offsets = [0, 0], sizes = [8, 48], strides = [1, 1]} : vector<8x64xf32> to vector<8x48xf32>
    %230 = arith.negf %229 : vector<8x48xf32>
    %231 = math.exp %230 : vector<8x48xf32>
    %cst_47 = arith.constant 1.000000e+00 : f32
    %232 = vector.broadcast %cst_47 : f32 to vector<8x48xf32>
    %233 = arith.addf %232, %231 : vector<8x48xf32>
    %234 = arith.divf %232, %233 : vector<8x48xf32>
    %235 = vector.extract_strided_slice %234 {offsets = [0, 0], sizes = [8, 16], strides = [1, 1]} : vector<8x48xf32> to vector<8x16xf32>
    %236 = vector.extract_strided_slice %234 {offsets = [0, 16], sizes = [8, 16], strides = [1, 1]} : vector<8x48xf32> to vector<8x16xf32>
    %237 = vector.extract_strided_slice %234 {offsets = [0, 32], sizes = [8, 16], strides = [1, 1]} : vector<8x48xf32> to vector<8x16xf32>
    %238 = vector.extract_strided_slice %210 {offsets = [0, 48], sizes = [8, 16], strides = [1, 1]} : vector<8x64xf32> to vector<8x16xf32>
    %239 = math.tanh %238 : vector<8x16xf32>
    %240 = arith.mulf %236, %187 : vector<8x16xf32>
    %241 = arith.mulf %235, %239 : vector<8x16xf32>
    %242 = arith.addf %240, %241 : vector<8x16xf32>
    %243 = math.tanh %242 : vector<8x16xf32>
    %244 = arith.mulf %237, %243 : vector<8x16xf32>
    %245 = arith.select %204, %244, %186 : vector<8x16xi1>, vector<8x16xf32>
    %246 = arith.select %204, %242, %187 : vector<8x16xi1>, vector<8x16xf32>
    %c4_i32 = arith.constant 4 : i32
    %c7_i32_48 = arith.constant 7 : i32
    %247 = arith.subi %c7_i32_48, %c4_i32 : i32
    %c8_i32_49 = arith.constant 8 : i32
    %248 = arith.muli %c4_i32, %c8_i32_49 : i32
    %249 = tpu.assume_multiple %248, 8 : i32
    %250 = arith.index_cast %249 : i32 to index
    %c0_50 = arith.constant 0 : index
    %251 = vector.load %arg8[%250, %c0_50] : memref<64x128xf32, #tpu.memory_space<vmem>>, vector<8x128xf32>
    %c8_i32_51 = arith.constant 8 : i32
    %252 = arith.muli %247, %c8_i32_51 : i32
    %253 = tpu.assume_multiple %252, 8 : i32
    %254 = arith.index_cast %253 : i32 to index
    %c0_52 = arith.constant 0 : index
    %255 = vector.load %arg8[%254, %c0_52] : memref<64x128xf32, #tpu.memory_space<vmem>>, vector<8x128xf32>
    %256 = vector.broadcast %c4_i32 : i32 to vector<8x1xi32>
    %257 = arith.cmpi sgt, %7, %256 : vector<8x1xi32>
    %258 = vector.shape_cast %257 : vector<8x1xi1> to vector<8x1xi1>
    %259 = vector.broadcast %258 : vector<8x1xi1> to vector<8x16xi1>
    %260 = vector.broadcast %247 : i32 to vector<8x1xi32>
    %261 = arith.cmpi sgt, %7, %260 : vector<8x1xi32>
    %262 = vector.shape_cast %261 : vector<8x1xi1> to vector<8x1xi1>
    %263 = vector.broadcast %262 : vector<8x1xi1> to vector<8x16xi1>
    %264 = vector.extract_strided_slice %251 {offsets = [0, 0], sizes = [8, 64], strides = [1, 1]} : vector<8x128xf32> to vector<8x64xf32>
    %cst_53 = arith.constant dense<0.000000e+00> : vector<8x64xf32>
    %265 = tpu.matmul %227, %8, %cst_53 {dimension_numbers = #tpu.dot_dimension_numbers<[1], [0], [0], [1], [0, 0, 1, 1], [], []>} : vector<8x16xf32>, vector<16x64xf32>, vector<8x64xf32> -> vector<8x64xf32>
    %266 = arith.addf %264, %265 : vector<8x64xf32>
    %267 = vector.extract_strided_slice %255 {offsets = [0, 64], sizes = [8, 64], strides = [1, 1]} : vector<8x128xf32> to vector<8x64xf32>
    %cst_54 = arith.constant dense<0.000000e+00> : vector<8x64xf32>
    %268 = tpu.matmul %245, %9, %cst_54 {dimension_numbers = #tpu.dot_dimension_numbers<[1], [0], [0], [1], [0, 0, 1, 1], [], []>} : vector<8x16xf32>, vector<16x64xf32>, vector<8x64xf32> -> vector<8x64xf32>
    %269 = arith.addf %267, %268 : vector<8x64xf32>
    %270 = vector.extract_strided_slice %266 {offsets = [0, 0], sizes = [8, 48], strides = [1, 1]} : vector<8x64xf32> to vector<8x48xf32>
    %271 = arith.negf %270 : vector<8x48xf32>
    %272 = math.exp %271 : vector<8x48xf32>
    %cst_55 = arith.constant 1.000000e+00 : f32
    %273 = vector.broadcast %cst_55 : f32 to vector<8x48xf32>
    %274 = arith.addf %273, %272 : vector<8x48xf32>
    %275 = arith.divf %273, %274 : vector<8x48xf32>
    %276 = vector.extract_strided_slice %275 {offsets = [0, 0], sizes = [8, 16], strides = [1, 1]} : vector<8x48xf32> to vector<8x16xf32>
    %277 = vector.extract_strided_slice %275 {offsets = [0, 16], sizes = [8, 16], strides = [1, 1]} : vector<8x48xf32> to vector<8x16xf32>
    %278 = vector.extract_strided_slice %275 {offsets = [0, 32], sizes = [8, 16], strides = [1, 1]} : vector<8x48xf32> to vector<8x16xf32>
    %279 = vector.extract_strided_slice %266 {offsets = [0, 48], sizes = [8, 16], strides = [1, 1]} : vector<8x64xf32> to vector<8x16xf32>
    %280 = math.tanh %279 : vector<8x16xf32>
    %281 = arith.mulf %277, %228 : vector<8x16xf32>
    %282 = arith.mulf %276, %280 : vector<8x16xf32>
    %283 = arith.addf %281, %282 : vector<8x16xf32>
    %284 = math.tanh %283 : vector<8x16xf32>
    %285 = arith.mulf %278, %284 : vector<8x16xf32>
    %286 = arith.select %259, %285, %227 : vector<8x16xi1>, vector<8x16xf32>
    %287 = arith.select %259, %283, %228 : vector<8x16xi1>, vector<8x16xf32>
    %288 = vector.extract_strided_slice %269 {offsets = [0, 0], sizes = [8, 48], strides = [1, 1]} : vector<8x64xf32> to vector<8x48xf32>
    %289 = arith.negf %288 : vector<8x48xf32>
    %290 = math.exp %289 : vector<8x48xf32>
    %cst_56 = arith.constant 1.000000e+00 : f32
    %291 = vector.broadcast %cst_56 : f32 to vector<8x48xf32>
    %292 = arith.addf %291, %290 : vector<8x48xf32>
    %293 = arith.divf %291, %292 : vector<8x48xf32>
    %294 = vector.extract_strided_slice %293 {offsets = [0, 0], sizes = [8, 16], strides = [1, 1]} : vector<8x48xf32> to vector<8x16xf32>
    %295 = vector.extract_strided_slice %293 {offsets = [0, 16], sizes = [8, 16], strides = [1, 1]} : vector<8x48xf32> to vector<8x16xf32>
    %296 = vector.extract_strided_slice %293 {offsets = [0, 32], sizes = [8, 16], strides = [1, 1]} : vector<8x48xf32> to vector<8x16xf32>
    %297 = vector.extract_strided_slice %269 {offsets = [0, 48], sizes = [8, 16], strides = [1, 1]} : vector<8x64xf32> to vector<8x16xf32>
    %298 = math.tanh %297 : vector<8x16xf32>
    %299 = arith.mulf %295, %246 : vector<8x16xf32>
    %300 = arith.mulf %294, %298 : vector<8x16xf32>
    %301 = arith.addf %299, %300 : vector<8x16xf32>
    %302 = math.tanh %301 : vector<8x16xf32>
    %303 = arith.mulf %296, %302 : vector<8x16xf32>
    %304 = arith.select %263, %303, %245 : vector<8x16xi1>, vector<8x16xf32>
    %305 = arith.select %263, %301, %246 : vector<8x16xi1>, vector<8x16xf32>
    %c5_i32 = arith.constant 5 : i32
    %c7_i32_57 = arith.constant 7 : i32
    %306 = arith.subi %c7_i32_57, %c5_i32 : i32
    %c8_i32_58 = arith.constant 8 : i32
    %307 = arith.muli %c5_i32, %c8_i32_58 : i32
    %308 = tpu.assume_multiple %307, 8 : i32
    %309 = arith.index_cast %308 : i32 to index
    %c0_59 = arith.constant 0 : index
    %310 = vector.load %arg8[%309, %c0_59] : memref<64x128xf32, #tpu.memory_space<vmem>>, vector<8x128xf32>
    %c8_i32_60 = arith.constant 8 : i32
    %311 = arith.muli %306, %c8_i32_60 : i32
    %312 = tpu.assume_multiple %311, 8 : i32
    %313 = arith.index_cast %312 : i32 to index
    %c0_61 = arith.constant 0 : index
    %314 = vector.load %arg8[%313, %c0_61] : memref<64x128xf32, #tpu.memory_space<vmem>>, vector<8x128xf32>
    %315 = vector.broadcast %c5_i32 : i32 to vector<8x1xi32>
    %316 = arith.cmpi sgt, %7, %315 : vector<8x1xi32>
    %317 = vector.shape_cast %316 : vector<8x1xi1> to vector<8x1xi1>
    %318 = vector.broadcast %317 : vector<8x1xi1> to vector<8x16xi1>
    %319 = vector.broadcast %306 : i32 to vector<8x1xi32>
    %320 = arith.cmpi sgt, %7, %319 : vector<8x1xi32>
    %321 = vector.shape_cast %320 : vector<8x1xi1> to vector<8x1xi1>
    %322 = vector.broadcast %321 : vector<8x1xi1> to vector<8x16xi1>
    %323 = vector.extract_strided_slice %310 {offsets = [0, 0], sizes = [8, 64], strides = [1, 1]} : vector<8x128xf32> to vector<8x64xf32>
    %cst_62 = arith.constant dense<0.000000e+00> : vector<8x64xf32>
    %324 = tpu.matmul %286, %8, %cst_62 {dimension_numbers = #tpu.dot_dimension_numbers<[1], [0], [0], [1], [0, 0, 1, 1], [], []>} : vector<8x16xf32>, vector<16x64xf32>, vector<8x64xf32> -> vector<8x64xf32>
    %325 = arith.addf %323, %324 : vector<8x64xf32>
    %326 = vector.extract_strided_slice %314 {offsets = [0, 64], sizes = [8, 64], strides = [1, 1]} : vector<8x128xf32> to vector<8x64xf32>
    %cst_63 = arith.constant dense<0.000000e+00> : vector<8x64xf32>
    %327 = tpu.matmul %304, %9, %cst_63 {dimension_numbers = #tpu.dot_dimension_numbers<[1], [0], [0], [1], [0, 0, 1, 1], [], []>} : vector<8x16xf32>, vector<16x64xf32>, vector<8x64xf32> -> vector<8x64xf32>
    %328 = arith.addf %326, %327 : vector<8x64xf32>
    %329 = vector.extract_strided_slice %325 {offsets = [0, 0], sizes = [8, 48], strides = [1, 1]} : vector<8x64xf32> to vector<8x48xf32>
    %330 = arith.negf %329 : vector<8x48xf32>
    %331 = math.exp %330 : vector<8x48xf32>
    %cst_64 = arith.constant 1.000000e+00 : f32
    %332 = vector.broadcast %cst_64 : f32 to vector<8x48xf32>
    %333 = arith.addf %332, %331 : vector<8x48xf32>
    %334 = arith.divf %332, %333 : vector<8x48xf32>
    %335 = vector.extract_strided_slice %334 {offsets = [0, 0], sizes = [8, 16], strides = [1, 1]} : vector<8x48xf32> to vector<8x16xf32>
    %336 = vector.extract_strided_slice %334 {offsets = [0, 16], sizes = [8, 16], strides = [1, 1]} : vector<8x48xf32> to vector<8x16xf32>
    %337 = vector.extract_strided_slice %334 {offsets = [0, 32], sizes = [8, 16], strides = [1, 1]} : vector<8x48xf32> to vector<8x16xf32>
    %338 = vector.extract_strided_slice %325 {offsets = [0, 48], sizes = [8, 16], strides = [1, 1]} : vector<8x64xf32> to vector<8x16xf32>
    %339 = math.tanh %338 : vector<8x16xf32>
    %340 = arith.mulf %336, %287 : vector<8x16xf32>
    %341 = arith.mulf %335, %339 : vector<8x16xf32>
    %342 = arith.addf %340, %341 : vector<8x16xf32>
    %343 = math.tanh %342 : vector<8x16xf32>
    %344 = arith.mulf %337, %343 : vector<8x16xf32>
    %345 = arith.select %318, %344, %286 : vector<8x16xi1>, vector<8x16xf32>
    %346 = arith.select %318, %342, %287 : vector<8x16xi1>, vector<8x16xf32>
    %347 = vector.extract_strided_slice %328 {offsets = [0, 0], sizes = [8, 48], strides = [1, 1]} : vector<8x64xf32> to vector<8x48xf32>
    %348 = arith.negf %347 : vector<8x48xf32>
    %349 = math.exp %348 : vector<8x48xf32>
    %cst_65 = arith.constant 1.000000e+00 : f32
    %350 = vector.broadcast %cst_65 : f32 to vector<8x48xf32>
    %351 = arith.addf %350, %349 : vector<8x48xf32>
    %352 = arith.divf %350, %351 : vector<8x48xf32>
    %353 = vector.extract_strided_slice %352 {offsets = [0, 0], sizes = [8, 16], strides = [1, 1]} : vector<8x48xf32> to vector<8x16xf32>
    %354 = vector.extract_strided_slice %352 {offsets = [0, 16], sizes = [8, 16], strides = [1, 1]} : vector<8x48xf32> to vector<8x16xf32>
    %355 = vector.extract_strided_slice %352 {offsets = [0, 32], sizes = [8, 16], strides = [1, 1]} : vector<8x48xf32> to vector<8x16xf32>
    %356 = vector.extract_strided_slice %328 {offsets = [0, 48], sizes = [8, 16], strides = [1, 1]} : vector<8x64xf32> to vector<8x16xf32>
    %357 = math.tanh %356 : vector<8x16xf32>
    %358 = arith.mulf %354, %305 : vector<8x16xf32>
    %359 = arith.mulf %353, %357 : vector<8x16xf32>
    %360 = arith.addf %358, %359 : vector<8x16xf32>
    %361 = math.tanh %360 : vector<8x16xf32>
    %362 = arith.mulf %355, %361 : vector<8x16xf32>
    %363 = arith.select %322, %362, %304 : vector<8x16xi1>, vector<8x16xf32>
    %364 = arith.select %322, %360, %305 : vector<8x16xi1>, vector<8x16xf32>
    %c6_i32 = arith.constant 6 : i32
    %c7_i32_66 = arith.constant 7 : i32
    %365 = arith.subi %c7_i32_66, %c6_i32 : i32
    %c8_i32_67 = arith.constant 8 : i32
    %366 = arith.muli %c6_i32, %c8_i32_67 : i32
    %367 = tpu.assume_multiple %366, 8 : i32
    %368 = arith.index_cast %367 : i32 to index
    %c0_68 = arith.constant 0 : index
    %369 = vector.load %arg8[%368, %c0_68] : memref<64x128xf32, #tpu.memory_space<vmem>>, vector<8x128xf32>
    %c8_i32_69 = arith.constant 8 : i32
    %370 = arith.muli %365, %c8_i32_69 : i32
    %371 = tpu.assume_multiple %370, 8 : i32
    %372 = arith.index_cast %371 : i32 to index
    %c0_70 = arith.constant 0 : index
    %373 = vector.load %arg8[%372, %c0_70] : memref<64x128xf32, #tpu.memory_space<vmem>>, vector<8x128xf32>
    %374 = vector.broadcast %c6_i32 : i32 to vector<8x1xi32>
    %375 = arith.cmpi sgt, %7, %374 : vector<8x1xi32>
    %376 = vector.shape_cast %375 : vector<8x1xi1> to vector<8x1xi1>
    %377 = vector.broadcast %376 : vector<8x1xi1> to vector<8x16xi1>
    %378 = vector.broadcast %365 : i32 to vector<8x1xi32>
    %379 = arith.cmpi sgt, %7, %378 : vector<8x1xi32>
    %380 = vector.shape_cast %379 : vector<8x1xi1> to vector<8x1xi1>
    %381 = vector.broadcast %380 : vector<8x1xi1> to vector<8x16xi1>
    %382 = vector.extract_strided_slice %369 {offsets = [0, 0], sizes = [8, 64], strides = [1, 1]} : vector<8x128xf32> to vector<8x64xf32>
    %cst_71 = arith.constant dense<0.000000e+00> : vector<8x64xf32>
    %383 = tpu.matmul %345, %8, %cst_71 {dimension_numbers = #tpu.dot_dimension_numbers<[1], [0], [0], [1], [0, 0, 1, 1], [], []>} : vector<8x16xf32>, vector<16x64xf32>, vector<8x64xf32> -> vector<8x64xf32>
    %384 = arith.addf %382, %383 : vector<8x64xf32>
    %385 = vector.extract_strided_slice %373 {offsets = [0, 64], sizes = [8, 64], strides = [1, 1]} : vector<8x128xf32> to vector<8x64xf32>
    %cst_72 = arith.constant dense<0.000000e+00> : vector<8x64xf32>
    %386 = tpu.matmul %363, %9, %cst_72 {dimension_numbers = #tpu.dot_dimension_numbers<[1], [0], [0], [1], [0, 0, 1, 1], [], []>} : vector<8x16xf32>, vector<16x64xf32>, vector<8x64xf32> -> vector<8x64xf32>
    %387 = arith.addf %385, %386 : vector<8x64xf32>
    %388 = vector.extract_strided_slice %384 {offsets = [0, 0], sizes = [8, 48], strides = [1, 1]} : vector<8x64xf32> to vector<8x48xf32>
    %389 = arith.negf %388 : vector<8x48xf32>
    %390 = math.exp %389 : vector<8x48xf32>
    %cst_73 = arith.constant 1.000000e+00 : f32
    %391 = vector.broadcast %cst_73 : f32 to vector<8x48xf32>
    %392 = arith.addf %391, %390 : vector<8x48xf32>
    %393 = arith.divf %391, %392 : vector<8x48xf32>
    %394 = vector.extract_strided_slice %393 {offsets = [0, 0], sizes = [8, 16], strides = [1, 1]} : vector<8x48xf32> to vector<8x16xf32>
    %395 = vector.extract_strided_slice %393 {offsets = [0, 16], sizes = [8, 16], strides = [1, 1]} : vector<8x48xf32> to vector<8x16xf32>
    %396 = vector.extract_strided_slice %393 {offsets = [0, 32], sizes = [8, 16], strides = [1, 1]} : vector<8x48xf32> to vector<8x16xf32>
    %397 = vector.extract_strided_slice %384 {offsets = [0, 48], sizes = [8, 16], strides = [1, 1]} : vector<8x64xf32> to vector<8x16xf32>
    %398 = math.tanh %397 : vector<8x16xf32>
    %399 = arith.mulf %395, %346 : vector<8x16xf32>
    %400 = arith.mulf %394, %398 : vector<8x16xf32>
    %401 = arith.addf %399, %400 : vector<8x16xf32>
    %402 = math.tanh %401 : vector<8x16xf32>
    %403 = arith.mulf %396, %402 : vector<8x16xf32>
    %404 = arith.select %377, %403, %345 : vector<8x16xi1>, vector<8x16xf32>
    %405 = arith.select %377, %401, %346 : vector<8x16xi1>, vector<8x16xf32>
    %406 = vector.extract_strided_slice %387 {offsets = [0, 0], sizes = [8, 48], strides = [1, 1]} : vector<8x64xf32> to vector<8x48xf32>
    %407 = arith.negf %406 : vector<8x48xf32>
    %408 = math.exp %407 : vector<8x48xf32>
    %cst_74 = arith.constant 1.000000e+00 : f32
    %409 = vector.broadcast %cst_74 : f32 to vector<8x48xf32>
    %410 = arith.addf %409, %408 : vector<8x48xf32>
    %411 = arith.divf %409, %410 : vector<8x48xf32>
    %412 = vector.extract_strided_slice %411 {offsets = [0, 0], sizes = [8, 16], strides = [1, 1]} : vector<8x48xf32> to vector<8x16xf32>
    %413 = vector.extract_strided_slice %411 {offsets = [0, 16], sizes = [8, 16], strides = [1, 1]} : vector<8x48xf32> to vector<8x16xf32>
    %414 = vector.extract_strided_slice %411 {offsets = [0, 32], sizes = [8, 16], strides = [1, 1]} : vector<8x48xf32> to vector<8x16xf32>
    %415 = vector.extract_strided_slice %387 {offsets = [0, 48], sizes = [8, 16], strides = [1, 1]} : vector<8x64xf32> to vector<8x16xf32>
    %416 = math.tanh %415 : vector<8x16xf32>
    %417 = arith.mulf %413, %364 : vector<8x16xf32>
    %418 = arith.mulf %412, %416 : vector<8x16xf32>
    %419 = arith.addf %417, %418 : vector<8x16xf32>
    %420 = math.tanh %419 : vector<8x16xf32>
    %421 = arith.mulf %414, %420 : vector<8x16xf32>
    %422 = arith.select %381, %421, %363 : vector<8x16xi1>, vector<8x16xf32>
    %423 = arith.select %381, %419, %364 : vector<8x16xi1>, vector<8x16xf32>
    %c7_i32_75 = arith.constant 7 : i32
    %c7_i32_76 = arith.constant 7 : i32
    %424 = arith.subi %c7_i32_76, %c7_i32_75 : i32
    %c8_i32_77 = arith.constant 8 : i32
    %425 = arith.muli %c7_i32_75, %c8_i32_77 : i32
    %426 = tpu.assume_multiple %425, 8 : i32
    %427 = arith.index_cast %426 : i32 to index
    %c0_78 = arith.constant 0 : index
    %428 = vector.load %arg8[%427, %c0_78] : memref<64x128xf32, #tpu.memory_space<vmem>>, vector<8x128xf32>
    %c8_i32_79 = arith.constant 8 : i32
    %429 = arith.muli %424, %c8_i32_79 : i32
    %430 = tpu.assume_multiple %429, 8 : i32
    %431 = arith.index_cast %430 : i32 to index
    %c0_80 = arith.constant 0 : index
    %432 = vector.load %arg8[%431, %c0_80] : memref<64x128xf32, #tpu.memory_space<vmem>>, vector<8x128xf32>
    %433 = vector.broadcast %c7_i32_75 : i32 to vector<8x1xi32>
    %434 = arith.cmpi sgt, %7, %433 : vector<8x1xi32>
    %435 = vector.shape_cast %434 : vector<8x1xi1> to vector<8x1xi1>
    %436 = vector.broadcast %435 : vector<8x1xi1> to vector<8x16xi1>
    %437 = vector.broadcast %424 : i32 to vector<8x1xi32>
    %438 = arith.cmpi sgt, %7, %437 : vector<8x1xi32>
    %439 = vector.shape_cast %438 : vector<8x1xi1> to vector<8x1xi1>
    %440 = vector.broadcast %439 : vector<8x1xi1> to vector<8x16xi1>
    %441 = vector.extract_strided_slice %428 {offsets = [0, 0], sizes = [8, 64], strides = [1, 1]} : vector<8x128xf32> to vector<8x64xf32>
    %cst_81 = arith.constant dense<0.000000e+00> : vector<8x64xf32>
    %442 = tpu.matmul %404, %8, %cst_81 {dimension_numbers = #tpu.dot_dimension_numbers<[1], [0], [0], [1], [0, 0, 1, 1], [], []>} : vector<8x16xf32>, vector<16x64xf32>, vector<8x64xf32> -> vector<8x64xf32>
    %443 = arith.addf %441, %442 : vector<8x64xf32>
    %444 = vector.extract_strided_slice %432 {offsets = [0, 64], sizes = [8, 64], strides = [1, 1]} : vector<8x128xf32> to vector<8x64xf32>
    %cst_82 = arith.constant dense<0.000000e+00> : vector<8x64xf32>
    %445 = tpu.matmul %422, %9, %cst_82 {dimension_numbers = #tpu.dot_dimension_numbers<[1], [0], [0], [1], [0, 0, 1, 1], [], []>} : vector<8x16xf32>, vector<16x64xf32>, vector<8x64xf32> -> vector<8x64xf32>
    %446 = arith.addf %444, %445 : vector<8x64xf32>
    %447 = vector.extract_strided_slice %443 {offsets = [0, 0], sizes = [8, 48], strides = [1, 1]} : vector<8x64xf32> to vector<8x48xf32>
    %448 = arith.negf %447 : vector<8x48xf32>
    %449 = math.exp %448 : vector<8x48xf32>
    %cst_83 = arith.constant 1.000000e+00 : f32
    %450 = vector.broadcast %cst_83 : f32 to vector<8x48xf32>
    %451 = arith.addf %450, %449 : vector<8x48xf32>
    %452 = arith.divf %450, %451 : vector<8x48xf32>
    %453 = vector.extract_strided_slice %452 {offsets = [0, 0], sizes = [8, 16], strides = [1, 1]} : vector<8x48xf32> to vector<8x16xf32>
    %454 = vector.extract_strided_slice %452 {offsets = [0, 16], sizes = [8, 16], strides = [1, 1]} : vector<8x48xf32> to vector<8x16xf32>
    %455 = vector.extract_strided_slice %452 {offsets = [0, 32], sizes = [8, 16], strides = [1, 1]} : vector<8x48xf32> to vector<8x16xf32>
    %456 = vector.extract_strided_slice %443 {offsets = [0, 48], sizes = [8, 16], strides = [1, 1]} : vector<8x64xf32> to vector<8x16xf32>
    %457 = math.tanh %456 : vector<8x16xf32>
    %458 = arith.mulf %454, %405 : vector<8x16xf32>
    %459 = arith.mulf %453, %457 : vector<8x16xf32>
    %460 = arith.addf %458, %459 : vector<8x16xf32>
    %461 = math.tanh %460 : vector<8x16xf32>
    %462 = arith.mulf %455, %461 : vector<8x16xf32>
    %463 = arith.select %436, %462, %404 : vector<8x16xi1>, vector<8x16xf32>
    %464 = arith.select %436, %460, %405 : vector<8x16xi1>, vector<8x16xf32>
    %465 = vector.extract_strided_slice %446 {offsets = [0, 0], sizes = [8, 48], strides = [1, 1]} : vector<8x64xf32> to vector<8x48xf32>
    %466 = arith.negf %465 : vector<8x48xf32>
    %467 = math.exp %466 : vector<8x48xf32>
    %cst_84 = arith.constant 1.000000e+00 : f32
    %468 = vector.broadcast %cst_84 : f32 to vector<8x48xf32>
    %469 = arith.addf %468, %467 : vector<8x48xf32>
    %470 = arith.divf %468, %469 : vector<8x48xf32>
    %471 = vector.extract_strided_slice %470 {offsets = [0, 0], sizes = [8, 16], strides = [1, 1]} : vector<8x48xf32> to vector<8x16xf32>
    %472 = vector.extract_strided_slice %470 {offsets = [0, 16], sizes = [8, 16], strides = [1, 1]} : vector<8x48xf32> to vector<8x16xf32>
    %473 = vector.extract_strided_slice %470 {offsets = [0, 32], sizes = [8, 16], strides = [1, 1]} : vector<8x48xf32> to vector<8x16xf32>
    %474 = vector.extract_strided_slice %446 {offsets = [0, 48], sizes = [8, 16], strides = [1, 1]} : vector<8x64xf32> to vector<8x16xf32>
    %475 = math.tanh %474 : vector<8x16xf32>
    %476 = arith.mulf %472, %423 : vector<8x16xf32>
    %477 = arith.mulf %471, %475 : vector<8x16xf32>
    %478 = arith.addf %476, %477 : vector<8x16xf32>
    %479 = math.tanh %478 : vector<8x16xf32>
    %480 = arith.mulf %473, %479 : vector<8x16xf32>
    %481 = arith.select %440, %480, %422 : vector<8x16xi1>, vector<8x16xf32>
    %482 = arith.select %440, %478, %423 : vector<8x16xi1>, vector<8x16xf32>
    %c8_i32_85 = arith.constant 8 : i32
    %c0_86 = arith.constant 0 : index
    %c0_87 = arith.constant 0 : index
    %483 = vector.load %arg7[%c0_86, %c0_87] : memref<8x32xf32, #tpu.memory_space<vmem>>, vector<8x16xf32>
    tpu.vector_store %arg7[%c0_86, %c0_87], %463 {strides = array<i32>} : memref<8x32xf32, #tpu.memory_space<vmem>>, vector<8x16xf32>,
    %c0_88 = arith.constant 0 : index
    %c16 = arith.constant 16 : index
    %484 = vector.load %arg7[%c0_88, %c16] : memref<8x32xf32, #tpu.memory_space<vmem>>, vector<8x16xf32>
    tpu.vector_store %arg7[%c0_88, %c16], %481 {strides = array<i32>} : memref<8x32xf32, #tpu.memory_space<vmem>>, vector<8x16xf32>,
    return
  }
  func.func @transform_0(%arg0: i32) -> (i32, i32) {
    %c0_i32 = arith.constant 0 : i32
    %c0_i32_0 = arith.constant 0 : i32
    %c0_i32_1 = arith.constant 0 : i32
    return %c0_i32, %c0_i32_0 : i32, i32
  }
  func.func @transform_1(%arg0: i32) -> (i32, i32) {
    %c0_i32 = arith.constant 0 : i32
    %c0_i32_0 = arith.constant 0 : i32
    %c0_i32_1 = arith.constant 0 : i32
    return %c0_i32, %c0_i32_0 : i32, i32
  }
  func.func @transform_2(%arg0: i32) -> (i32, i32) {
    %c0_i32 = arith.constant 0 : i32
    %c0_i32_0 = arith.constant 0 : i32
    %c0_i32_1 = arith.constant 0 : i32
    return %c0_i32, %c0_i32_0 : i32, i32
  }
  func.func @transform_3(%arg0: i32) -> (i32, i32) {
    %c0_i32 = arith.constant 0 : i32
    %c0_i32_0 = arith.constant 0 : i32
    %c0_i32_1 = arith.constant 0 : i32
    return %c0_i32, %c0_i32_0 : i32, i32
  }
  func.func @transform_4(%arg0: i32) -> (i32, i32) {
    %c0_i32 = arith.constant 0 : i32
    %c0_i32_0 = arith.constant 0 : i32
    %c0_i32_1 = arith.constant 0 : i32
    return %c0_i32, %c0_i32_0 : i32, i32
  }
  func.func @transform_5(%arg0: i32) -> (i32, i32) {
    %c0_i32 = arith.constant 0 : i32
    %c0_i32_0 = arith.constant 0 : i32
    %c0_i32_1 = arith.constant 0 : i32
    return %c0_i32, %c0_i32_0 : i32, i32
  }
  func.func @transform_6(%arg0: i32) -> (i32, i32) {
    %c0_i32 = arith.constant 0 : i32
    %c0_i32_0 = arith.constant 0 : i32
    %c0_i32_1 = arith.constant 0 : i32
    return %c0_i32, %c0_i32_0 : i32, i32
  }
}

</mosaic_0001>

<llo_original>
// kernel: char_lstm_forward.1
$region0: #{char_lstm_forward.1}
  #allocation0 [shape = 'u32[]', space=smem, size = 0x4, offset = 0x4, fixed_abs, tag = 'smem constant byte address 0x4 - core index']
  #allocation1 [shape = 'u32[144,128]{1,0:T(1,128)}', space=vmem, size = 0x12000, scoped, tag = 'internal scratch']
  #allocation2 [shape = 'f32[64,128]{1,0:T(8,128)}', space=vmem, size = 0x8000, scoped, tag = 'scratch operand']
  %s0 = inlined_call_operand.vmem [shape: f32[64,16], index: 0, kind: input, shape index: {}]
  %s1 = inlined_call_operand.vmem [shape: s32[8,1], index: 1, kind: input, shape index: {}]
  %s2 = inlined_call_operand.vmem [shape: f32[16,128], index: 2, kind: input, shape index: {}]
  %s3 = inlined_call_operand.vmem [shape: f32[16,64], index: 3, kind: input, shape index: {}]
  %s4 = inlined_call_operand.vmem [shape: f32[16,64], index: 4, kind: input, shape index: {}]
  %s5 = inlined_call_operand.vmem [shape: f32[1,128], index: 5, kind: input, shape index: {}]
  %s6 = inlined_call_operand.hbm [shape: f32[8,32], index: 6, kind: output, shape index: {}]
  %s7 = sld [smem:[#allocation0]]
  $region34: #{char_lstm_forward.1} parent=0
    _
  %s9 = ssub.s32 1, %s7
  %s10 = scalar_select 0, %s9, %s7
  $region1: #{char_lstm_forward.1} parent=0
    #allocation3 [shape = 'u8[4096]{0}', space=vmem, size = 0x1000, scoped, tag = 'output window, operand 0, single buffered']
    #allocation4 [shape = 's32[1]{0}', space=sflag, size = 0x4, scoped, tag = 'scoped memory for char_lstm_forward.1']
    %11 = vsyncpa [#allocation4], 0
    // Predicated region
    $region2: #{char_lstm_forward.1} parent=1 // pred_check
      _
    $region3: #{char_lstm_forward.1} parent=1 // pred_check_branch
      %13 = sbr.rel (0) target = $region5
    $region4: #{char_lstm_forward.1} parent=1 // pred_region
      _
    $region5: #{char_lstm_forward.1} parent=1 // pred_fallthru
      _
    // Predicated region
    $region6: #{char_lstm_forward.1} parent=1 // pred_check
      _
    $region7: #{char_lstm_forward.1} parent=1 // pred_check_branch
      %15 = sbr.rel (0) target = $region9
    $region8: #{char_lstm_forward.1} parent=1 // pred_region
      _
    $region9: #{char_lstm_forward.1} parent=1 // pred_fallthru
      _
    // Predicated region
    $region10: #{char_lstm_forward.1} parent=1 // pred_check
      _
    $region11: #{char_lstm_forward.1} parent=1 // pred_check_branch
      %17 = sbr.rel (0) target = $region13
    $region12: #{char_lstm_forward.1} parent=1 // pred_region
      _
    $region13: #{char_lstm_forward.1} parent=1 // pred_fallthru
      _
    // Predicated region
    $region14: #{char_lstm_forward.1} parent=1 // pred_check
      _
    $region15: #{char_lstm_forward.1} parent=1 // pred_check_branch
      %19 = sbr.rel (0) target = $region17
    $region16: #{char_lstm_forward.1} parent=1 // pred_region
      _
    $region17: #{char_lstm_forward.1} parent=1 // pred_fallthru
      _
    // Predicated region
    $region18: #{char_lstm_forward.1} parent=1 // pred_check
      _
    $region19: #{char_lstm_forward.1} parent=1 // pred_check_branch
      %21 = sbr.rel (0) target = $region21
    $region20: #{char_lstm_forward.1} parent=1 // pred_region
      _
    $region21: #{char_lstm_forward.1} parent=1 // pred_fallthru
      _
    // Predicated region
    $region22: #{char_lstm_forward.1} parent=1 // pred_check
      _
    $region23: #{char_lstm_forward.1} parent=1 // pred_check_branch
      %23 = sbr.rel (0) target = $region25
    $region24: #{char_lstm_forward.1} parent=1 // pred_region
      _
    $region25: #{char_lstm_forward.1} parent=1 // pred_fallthru
      _
    %v24 = vld [vmem:[%s0] sm:$0xff]
    %v25 = vld [vmem:[%s0 + $0x8] sm:$0xff]
    %v26 = vld [vmem:[%s0 + $0x10] sm:$0xff]
    %v27 = vld [vmem:[%s0 + $0x18] sm:$0xff]
    %v28 = vld [vmem:[%s0 + $0x20] sm:$0xff]
    %v29 = vld [vmem:[%s0 + $0x28] sm:$0xff]
    %v30 = vld [vmem:[%s0 + $0x30] sm:$0xff]
    %v31 = vld [vmem:[%s0 + $0x38] sm:$0xff]
    %v32 = vld [vmem:[%s2] sm:$0xff]
    %v33 = vld [vmem:[%s2 + $0x8] sm:$0xff]
    %v34 = vld [vmem:[%s5] sm:$0x1]
    %v36 = vlaneseq
    %v37 = vshrl.u32 %v36, 7
    %v38 = vsub.s32 0, %v37
    %v39 = vrot.slane %v34, %v38
    %vm41 = vcmask 130048
    %v43 = vsel %vm41, %v24, 0
    %v46 = vsel %vm41, %v25, 0
    %v49 = vsel %vm41, %v26, 0
    %v52 = vsel %vm41, %v27, 0
    %v55 = vsel %vm41, %v28, 0
    %v58 = vsel %vm41, %v29, 0
    %v61 = vsel %vm41, %v30, 0
    %v64 = vsel %vm41, %v31, 0
    %66 = vmatprep.subr.mxu0 0.0
    %67 = vmatpush1.msra.mxu0 %v32
    %68 = vmatprep.subr.mxu0 0.0
    %69 = vmatpush1.msra.mxu0 %v33
    %70 = vmatprep.subr.mxu0 0.0
    %71 = vmatpush1.msra.mxu0 0.0
    %72 = vmatprep.subr.mxu0 0.0
    %73 = vmatpush1.msra.mxu0 0.0
    %74 = vmatprep.subr.mxu0 0.0
    %75 = vmatpush1.msra.mxu0 0.0
    %76 = vmatprep.subr.mxu0 0.0
    %77 = vmatpush1.msra.mxu0 0.0
    %78 = vmatprep.subr.mxu0 0.0
    %79 = vmatpush1.msra.mxu0 0.0
    %80 = vmatprep.subr.mxu0 0.0
    %81 = vmatpush1.msra.mxu0 0.0
    %82 = vmatprep.subr.mxu0 0.0
    %83 = vmatpush1.msra.mxu0 0.0
    %84 = vmatprep.subr.mxu0 0.0
    %85 = vmatpush1.msra.mxu0 0.0
    %86 = vmatprep.subr.mxu0 0.0
    %87 = vmatpush1.msra.mxu0 0.0
    %88 = vmatprep.subr.mxu0 0.0
    %89 = vmatpush1.msra.mxu0 0.0
    %90 = vmatprep.subr.mxu0 0.0
    %91 = vmatpush1.msra.mxu0 0.0
    %92 = vmatprep.subr.mxu0 0.0
    %93 = vmatpush1.msra.mxu0 0.0
    %94 = vmatprep.subr.mxu0 0.0
    %95 = vmatpush1.msra.mxu0 0.0
    %96 = vmatprep.subr.mxu0 0.0
    %97 = vmatpush1.msra.mxu0 0.0
    %98 = vmatprep.subr.mxu0 0.0
    %99 = vmatpush1.msra.mxu0 0.0
    %100 = vmatprep.subr.mxu0 0.0
    %101 = vmatpush1.msra.mxu0 0.0
    %102 = vmatprep.subr.mxu0 0.0
    %103 = vmatpush1.msra.mxu0 0.0
    %104 = vmatprep.subr.mxu0 0.0
    %105 = vmatpush1.msra.mxu0 0.0
    %106 = vmatprep.subr.mxu0 0.0
    %107 = vmatpush1.msra.mxu0 0.0
    %108 = vmatprep.subr.mxu0 0.0
    %109 = vmatpush1.msra.mxu0 0.0
    %110 = vmatprep.subr.mxu0 0.0
    %111 = vmatpush1.msra.mxu0 0.0
    %112 = vmatprep.subr.mxu0 0.0
    %113 = vmatpush1.msra.mxu0 0.0
    %114 = vmatprep.subr.mxu0 0.0
    %115 = vmatpush1.msra.mxu0 0.0
    %116 = vmatprep.subr.mxu0 0.0
    %117 = vmatpush1.msra.mxu0 0.0
    %118 = vmatprep.subr.mxu0 0.0
    %119 = vmatpush1.msra.mxu0 0.0
    %120 = vmatprep.subr.mxu0 0.0
    %121 = vmatpush1.msra.mxu0 0.0
    %122 = vmatprep.subr.mxu0 0.0
    %123 = vmatpush1.msra.mxu0 0.0
    %124 = vmatprep.subr.mxu0 0.0
    %125 = vmatpush1.msra.mxu0 0.0
    %126 = vmatprep.subr.mxu0 0.0
    %127 = vmatpush1.msra.mxu0 0.0
    %128 = vmatprep.subr.mxu0 0.0
    %129 = vmatpush1.msra.mxu0 0.0
    %130 = vmatprep.mubr.f32.mxu0 0.0
    %131 = vmatmul.mubr.f32.gmra.mrb[0].mxu0 %v43
    %v132 = vpop.f32.mrb[0].mxu0
    %v133 = vadd.f32 %v39, %v132
    %v134 = vpop.f32.mrb[0].mxu0
    %135 = vmatprep.mubr.f32.mxu0 0.0
    %136 = vmatmul.mubr.f32.gmra.mrb[0].mxu0 %v46
    %v137 = vpop.f32.mrb[0].mxu0
    %v138 = vadd.f32 %v39, %v137
    %v139 = vpop.f32.mrb[0].mxu0
    %140 = vmatprep.mubr.f32.mxu0 0.0
    %141 = vmatmul.mubr.f32.gmra.mrb[0].mxu0 %v49
    %v142 = vpop.f32.mrb[0].mxu0
    %v143 = vadd.f32 %v39, %v142
    %v144 = vpop.f32.mrb[0].mxu0
    %145 = vmatprep.mubr.f32.mxu0 0.0
    %146 = vmatmul.mubr.f32.gmra.mrb[0].mxu0 %v52
    %v147 = vpop.f32.mrb[0].mxu0
    %v148 = vadd.f32 %v39, %v147
    %v149 = vpop.f32.mrb[0].mxu0
    %150 = vmatprep.mubr.f32.mxu0 0.0
    %151 = vmatmul.mubr.f32.gmra.mrb[0].mxu0 %v55
    %v152 = vpop.f32.mrb[0].mxu0
    %v153 = vadd.f32 %v39, %v152
    %v154 = vpop.f32.mrb[0].mxu0
    %155 = vmatprep.mubr.f32.mxu0 0.0
    %156 = vmatmul.mubr.f32.gmra.mrb[0].mxu0 %v58
    %v157 = vpop.f32.mrb[0].mxu0
    %v158 = vadd.f32 %v39, %v157
    %v159 = vpop.f32.mrb[0].mxu0
    %160 = vmatprep.mubr.f32.mxu0 0.0
    %161 = vmatmul.mubr.f32.gmra.mrb[0].mxu0 %v61
    %v162 = vpop.f32.mrb[0].mxu0
    %v163 = vadd.f32 %v39, %v162
    %v164 = vpop.f32.mrb[0].mxu0
    %165 = vmatprep.mubr.f32.mxu0 0.0
    %166 = vmatmul.mubr.f32.gmra.mrb[0].mxu0 %v64
    %v167 = vpop.f32.mrb[0].mxu0
    %v168 = vadd.f32 %v39, %v167
    %v169 = vpop.f32.mrb[0].mxu0
    %170 = vdwg.mxu0
    %171 = vst [vmem:[#allocation2] sm:$0xff] %v133
    %172 = vst [vmem:[#allocation2 + $0x8] sm:$0xff] %v138
    %173 = vst [vmem:[#allocation2 + $0x10] sm:$0xff] %v143
    %174 = vst [vmem:[#allocation2 + $0x18] sm:$0xff] %v148
    %175 = vst [vmem:[#allocation2 + $0x20] sm:$0xff] %v153
    %176 = vst [vmem:[#allocation2 + $0x28] sm:$0xff] %v158
    %177 = vst [vmem:[#allocation2 + $0x30] sm:$0xff] %v163
    %178 = vst [vmem:[#allocation2 + $0x38] sm:$0xff] %v168
    %v179 = vld [vmem:[%s1] sm:$0xff]
    %v180 = vld [vmem:[%s3] sm:$0xff]
    %v181 = vld [vmem:[%s3 + $0x8] sm:$0xff]
    %v182 = vld [vmem:[%s4] sm:$0xff]
    %v183 = vld [vmem:[%s4 + $0x8] sm:$0xff]
    %v184 = vld [vmem:[#allocation2] sm:$0xff]
    %s185 = scalar_lea.vmem [#allocation2], 56
    %v186 = vld [vmem:[%s185] sm:$0xff]
    %vm187 = vcmp.gt.s32.totalorder %v179, 0
    %v188 = vsel %vm187, 1, 0
    %189 = vset.pattern.permute.xlu0 0
    %190 = vperm.xlu0 %189, %v188
    %v191 = vpop.permute.xlu0 %190
    %vm192 = vcmp.eq.s32.totalorder %v191, 1
    %vm193 = vcmp.gt.s32.totalorder %v179, 7
    %v194 = vsel %vm193, 1, 0
    %195 = vset.pattern.permute.xlu0 0
    %196 = vperm.xlu0 %195, %v194
    %v197 = vpop.permute.xlu0 %196
    %vm198 = vcmp.eq.s32.totalorder %v197, 1
    %v200 = vsel %vm41, 0.0, 0
    %202 = vmatprep.subr.mxu0 0.0
    %203 = vmatpush1.msra.mxu0 %v180
    %204 = vmatprep.subr.mxu0 0.0
    %205 = vmatpush1.msra.mxu0 %v181
    %206 = vmatprep.subr.mxu0 0.0
    %207 = vmatpush1.msra.mxu0 0.0
    %208 = vmatprep.subr.mxu0 0.0
    %209 = vmatpush1.msra.mxu0 0.0
    %210 = vmatprep.subr.mxu0 0.0
    %211 = vmatpush1.msra.mxu0 0.0
    %212 = vmatprep.subr.mxu0 0.0
    %213 = vmatpush1.msra.mxu0 0.0
    %214 = vmatprep.subr.mxu0 0.0
    %215 = vmatpush1.msra.mxu0 0.0
    %216 = vmatprep.subr.mxu0 0.0
    %217 = vmatpush1.msra.mxu0 0.0
    %218 = vmatprep.subr.mxu0 0.0
    %219 = vmatpush1.msra.mxu0 0.0
    %220 = vmatprep.subr.mxu0 0.0
    %221 = vmatpush1.msra.mxu0 0.0
    %222 = vmatprep.subr.mxu0 0.0
    %223 = vmatpush1.msra.mxu0 0.0
    %224 = vmatprep.subr.mxu0 0.0
    %225 = vmatpush1.msra.mxu0 0.0
    %226 = vmatprep.subr.mxu0 0.0
    %227 = vmatpush1.msra.mxu0 0.0
    %228 = vmatprep.subr.mxu0 0.0
    %229 = vmatpush1.msra.mxu0 0.0
    %230 = vmatprep.subr.mxu0 0.0
    %231 = vmatpush1.msra.mxu0 0.0
    %232 = vmatprep.subr.mxu0 0.0
    %233 = vmatpush1.msra.mxu0 0.0
    %234 = vmatprep.subr.mxu0 0.0
    %235 = vmatpush1.msra.mxu0 0.0
    %236 = vmatprep.subr.mxu0 0.0
    %237 = vmatpush1.msra.mxu0 0.0
    %238 = vmatprep.subr.mxu0 0.0
    %239 = vmatpush1.msra.mxu0 0.0
    %240 = vmatprep.subr.mxu0 0.0
    %241 = vmatpush1.msra.mxu0 0.0
    %242 = vmatprep.subr.mxu0 0.0
    %243 = vmatpush1.msra.mxu0 0.0
    %244 = vmatprep.subr.mxu0 0.0
    %245 = vmatpush1.msra.mxu0 0.0
    %246 = vmatprep.subr.mxu0 0.0
    %247 = vmatpush1.msra.mxu0 0.0
    %248 = vmatprep.subr.mxu0 0.0
    %249 = vmatpush1.msra.mxu0 0.0
    %250 = vmatprep.subr.mxu0 0.0
    %251 = vmatpush1.msra.mxu0 0.0
    %252 = vmatprep.subr.mxu0 0.0
    %253 = vmatpush1.msra.mxu0 0.0
    %254 = vmatprep.subr.mxu0 0.0
    %255 = vmatpush1.msra.mxu0 0.0
    %256 = vmatprep.subr.mxu0 0.0
    %257 = vmatpush1.msra.mxu0 0.0
    %258 = vmatprep.subr.mxu0 0.0
    %259 = vmatpush1.msra.mxu0 0.0
    %260 = vmatprep.subr.mxu0 0.0
    %261 = vmatpush1.msra.mxu0 0.0
    %262 = vmatprep.subr.mxu0 0.0
    %263 = vmatpush1.msra.mxu0 0.0
    %264 = vmatprep.subr.mxu0 0.0
    %265 = vmatpush1.msra.mxu0 0.0
    %266 = vmatprep.mubr.f32.mxu0 0.0
    %267 = vmatmul.mubr.f32.gmra.mrb[0].mxu0 %v200
    %v268 = vpop.f32.mrb[0].mxu0
    %v269 = vadd.f32 0.0, %v268
    %v270 = vpop.f32.mrb[0].mxu0
    %271 = vdwg.mxu0
    %v272 = vadd.f32 %v184, %v269
    %273 = vmatprep.subr.mxu0 0.0
    %274 = vmatpush1.msra.mxu0 %v182
    %275 = vmatprep.subr.mxu0 0.0
    %276 = vmatpush1.msra.mxu0 %v183
    %277 = vmatprep.subr.mxu0 0.0
    %278 = vmatpush1.msra.mxu0 0.0
    %279 = vmatprep.subr.mxu0 0.0
    %280 = vmatpush1.msra.mxu0 0.0
    %281 = vmatprep.subr.mxu0 0.0
    %282 = vmatpush1.msra.mxu0 0.0
    %283 = vmatprep.subr.mxu0 0.0
    %284 = vmatpush1.msra.mxu0 0.0
    %285 = vmatprep.subr.mxu0 0.0
    %286 = vmatpush1.msra.mxu0 0.0
    %287 = vmatprep.subr.mxu0 0.0
    %288 = vmatpush1.msra.mxu0 0.0
    %289 = vmatprep.subr.mxu0 0.0
    %290 = vmatpush1.msra.mxu0 0.0
    %291 = vmatprep.subr.mxu0 0.0
    %292 = vmatpush1.msra.mxu0 0.0
    %293 = vmatprep.subr.mxu0 0.0
    %294 = vmatpush1.msra.mxu0 0.0
    %295 = vmatprep.subr.mxu0 0.0
    %296 = vmatpush1.msra.mxu0 0.0
    %297 = vmatprep.subr.mxu0 0.0
    %298 = vmatpush1.msra.mxu0 0.0
    %299 = vmatprep.subr.mxu0 0.0
    %300 = vmatpush1.msra.mxu0 0.0
    %301 = vmatprep.subr.mxu0 0.0
    %302 = vmatpush1.msra.mxu0 0.0
    %303 = vmatprep.subr.mxu0 0.0
    %304 = vmatpush1.msra.mxu0 0.0
    %305 = vmatprep.subr.mxu0 0.0
    %306 = vmatpush1.msra.mxu0 0.0
    %307 = vmatprep.subr.mxu0 0.0
    %308 = vmatpush1.msra.mxu0 0.0
    %309 = vmatprep.subr.mxu0 0.0
    %310 = vmatpush1.msra.mxu0 0.0
    %311 = vmatprep.subr.mxu0 0.0
    %312 = vmatpush1.msra.mxu0 0.0
    %313 = vmatprep.subr.mxu0 0.0
    %314 = vmatpush1.msra.mxu0 0.0
    %315 = vmatprep.subr.mxu0 0.0
    %316 = vmatpush1.msra.mxu0 0.0
    %317 = vmatprep.subr.mxu0 0.0
    %318 = vmatpush1.msra.mxu0 0.0
    %319 = vmatprep.subr.mxu0 0.0
    %320 = vmatpush1.msra.mxu0 0.0
    %321 = vmatprep.subr.mxu0 0.0
    %322 = vmatpush1.msra.mxu0 0.0
    %323 = vmatprep.subr.mxu0 0.0
    %324 = vmatpush1.msra.mxu0 0.0
    %325 = vmatprep.subr.mxu0 0.0
    %326 = vmatpush1.msra.mxu0 0.0
    %327 = vmatprep.subr.mxu0 0.0
    %328 = vmatpush1.msra.mxu0 0.0
    %329 = vmatprep.subr.mxu0 0.0
    %330 = vmatpush1.msra.mxu0 0.0
    %331 = vmatprep.subr.mxu0 0.0
    %332 = vmatpush1.msra.mxu0 0.0
    %333 = vmatprep.subr.mxu0 0.0
    %334 = vmatpush1.msra.mxu0 0.0
    %335 = vmatprep.subr.mxu0 0.0
    %336 = vmatpush1.msra.mxu0 0.0
    %337 = vmatprep.mubr.f32.mxu0 0.0
    %338 = vmatmul.mubr.f32.gmra.mrb[0].mxu0 %v200
    %v339 = vpop.f32.mrb[0].mxu0
    %v340 = vadd.f32 0.0, %v339
    %v341 = vpop.f32.mrb[0].mxu0
    %342 = vdwg.mxu0
    %344 = vrot.lane.b32.xlu0 %v340, 64
    %v345 = vpop.permute.xlu0 %344
    %v347 = vadd.f32 %v186, %v345
    %v348 = vxor.u32 %v272, 2147483648
    %v349 = vmul.f32 %v348, 1.442695
    %v350 = vpow.pop %v349
    %v351 = vadd.f32 %v350, 1.0
    %v352 = vrcp.pop %v351
    %v353 = vmul.f32 1.0, %v352
    %v354 = vtanh.pop %v272
    %v355 = vmul.f32 %v353, 0.0
    %357 = vrot.lane.b32.xlu0 %v354, 80
    %v358 = vpop.permute.xlu0 %357
    %v360 = vmul.f32 %v353, %v358
    %362 = vrot.lane.b32.xlu0 %v360, 16
    %v363 = vpop.permute.xlu0 %362
    %v365 = vadd.f32 %v355, %v363
    %v366 = vtanh.pop %v365
    %368 = vrot.lane.b32.xlu0 %v366, 16
    %v369 = vpop.permute.xlu0 %368
    %v371 = vmul.f32 %v353, %v369
    %v372 = vsel %vm192, %v371, 0.0
    %v373 = vsel %vm192, %v365, 0.0
    %v374 = vxor.u32 %v347, 2147483648
    %v375 = vmul.f32 %v374, 1.442695
    %v376 = vpow.pop %v375
    %v377 = vadd.f32 %v376, 1.0
    %v378 = vrcp.pop %v377
    %v379 = vmul.f32 1.0, %v378
    %v380 = vtanh.pop %v347
    %v381 = vmul.f32 %v379, 0.0
    %383 = vrot.lane.b32.xlu0 %v380, 80
    %v384 = vpop.permute.xlu0 %383
    %v386 = vmul.f32 %v379, %v384
    %388 = vrot.lane.b32.xlu0 %v386, 16
    %v389 = vpop.permute.xlu0 %388
    %v391 = vadd.f32 %v381, %v389
    %v392 = vtanh.pop %v391
    %394 = vrot.lane.b32.xlu0 %v392, 16
    %v395 = vpop.permute.xlu0 %394
    %v397 = vmul.f32 %v379, %v395
    %v398 = vsel %vm198, %v397, 0.0
    %v399 = vsel %vm198, %v391, 0.0
    %s400 = scalar_lea.vmem [#allocation2], 8
    %v401 = vld [vmem:[%s400] sm:$0xff]
    %s402 = scalar_lea.vmem [#allocation2], 48
    %v403 = vld [vmem:[%s402] sm:$0xff]
    %vm404 = vcmp.gt.s32.totalorder %v179, 1
    %v405 = vsel %vm404, 1, 0
    %406 = vset.pattern.permute.xlu0 0
    %407 = vperm.xlu0 %406, %v405
    %v408 = vpop.permute.xlu0 %407
    %vm409 = vcmp.eq.s32.totalorder %v408, 1
    %vm410 = vcmp.gt.s32.totalorder %v179, 6
    %v411 = vsel %vm410, 1, 0
    %412 = vset.pattern.permute.xlu0 0
    %413 = vperm.xlu0 %412, %v411
    %v414 = vpop.permute.xlu0 %413
    %vm415 = vcmp.eq.s32.totalorder %v414, 1
    %417 = vrot.lane.b32.xlu0 %v372, 96
    %v418 = vpop.permute.xlu0 %417
    %v419 = vsel %vm41, %v418, 0
    %421 = vmatprep.subr.mxu0 0.0
    %422 = vmatpush1.msra.mxu0 %v180
    %423 = vmatprep.subr.mxu0 0.0
    %424 = vmatpush1.msra.mxu0 %v181
    %425 = vmatprep.subr.mxu0 0.0
    %426 = vmatpush1.msra.mxu0 0.0
    %427 = vmatprep.subr.mxu0 0.0
    %428 = vmatpush1.msra.mxu0 0.0
    %429 = vmatprep.subr.mxu0 0.0
    %430 = vmatpush1.msra.mxu0 0.0
    %431 = vmatprep.subr.mxu0 0.0
    %432 = vmatpush1.msra.mxu0 0.0
    %433 = vmatprep.subr.mxu0 0.0
    %434 = vmatpush1.msra.mxu0 0.0
    %435 = vmatprep.subr.mxu0 0.0
    %436 = vmatpush1.msra.mxu0 0.0
    %437 = vmatprep.subr.mxu0 0.0
    %438 = vmatpush1.msra.mxu0 0.0
    %439 = vmatprep.subr.mxu0 0.0
    %440 = vmatpush1.msra.mxu0 0.0
    %441 = vmatprep.subr.mxu0 0.0
    %442 = vmatpush1.msra.mxu0 0.0
    %443 = vmatprep.subr.mxu0 0.0
    %444 = vmatpush1.msra.mxu0 0.0
    %445 = vmatprep.subr.mxu0 0.0
    %446 = vmatpush1.msra.mxu0 0.0
    %447 = vmatprep.subr.mxu0 0.0
    %448 = vmatpush1.msra.mxu0 0.0
    %449 = vmatprep.subr.mxu0 0.0
    %450 = vmatpush1.msra.mxu0 0.0
    %451 = vmatprep.subr.mxu0 0.0
    %452 = vmatpush1.msra.mxu0 0.0
    %453 = vmatprep.subr.mxu0 0.0
    %454 = vmatpush1.msra.mxu0 0.0
    %455 = vmatprep.subr.mxu0 0.0
    %456 = vmatpush1.msra.mxu0 0.0
    %457 = vmatprep.subr.mxu0 0.0
    %458 = vmatpush1.msra.mxu0 0.0
    %459 = vmatprep.subr.mxu0 0.0
    %460 = vmatpush1.msra.mxu0 0.0
    %461 = vmatprep.subr.mxu0 0.0
    %462 = vmatpush1.msra.mxu0 0.0
    %463 = vmatprep.subr.mxu0 0.0
    %464 = vmatpush1.msra.mxu0 0.0
    %465 = vmatprep.subr.mxu0 0.0
    %466 = vmatpush1.msra.mxu0 0.0
    %467 = vmatprep.subr.mxu0 0.0
    %468 = vmatpush1.msra.mxu0 0.0
    %469 = vmatprep.subr.mxu0 0.0
    %470 = vmatpush1.msra.mxu0 0.0
    %471 = vmatprep.subr.mxu0 0.0
    %472 = vmatpush1.msra.mxu0 0.0
    %473 = vmatprep.subr.mxu0 0.0
    %474 = vmatpush1.msra.mxu0 0.0
    %475 = vmatprep.subr.mxu0 0.0
    %476 = vmatpush1.msra.mxu0 0.0
    %477 = vmatprep.subr.mxu0 0.0
    %478 = vmatpush1.msra.mxu0 0.0
    %479 = vmatprep.subr.mxu0 0.0
    %480 = vmatpush1.msra.mxu0 0.0
    %481 = vmatprep.subr.mxu0 0.0
    %482 = vmatpush1.msra.mxu0 0.0
    %483 = vmatprep.subr.mxu0 0.0
    %484 = vmatpush1.msra.mxu0 0.0
    %485 = vmatprep.mubr.f32.mxu0 0.0
    %486 = vmatmul.mubr.f32.gmra.mrb[0].mxu0 %v419
    %v487 = vpop.f32.mrb[0].mxu0
    %v488 = vadd.f32 0.0, %v487
    %v489 = vpop.f32.mrb[0].mxu0
    %490 = vdwg.mxu0
    %v491 = vadd.f32 %v401, %v488
    %493 = vrot.lane.b32.xlu0 %v398, 32
    %v494 = vpop.permute.xlu0 %493
    %v495 = vsel %vm41, %v494, 0
    %497 = vmatprep.subr.mxu0 0.0
    %498 = vmatpush1.msra.mxu0 %v182
    %499 = vmatprep.subr.mxu0 0.0
    %500 = vmatpush1.msra.mxu0 %v183
    %501 = vmatprep.subr.mxu0 0.0
    %502 = vmatpush1.msra.mxu0 0.0
    %503 = vmatprep.subr.mxu0 0.0
    %504 = vmatpush1.msra.mxu0 0.0
    %505 = vmatprep.subr.mxu0 0.0
    %506 = vmatpush1.msra.mxu0 0.0
    %507 = vmatprep.subr.mxu0 0.0
    %508 = vmatpush1.msra.mxu0 0.0
    %509 = vmatprep.subr.mxu0 0.0
    %510 = vmatpush1.msra.mxu0 0.0
    %511 = vmatprep.subr.mxu0 0.0
    %512 = vmatpush1.msra.mxu0 0.0
    %513 = vmatprep.subr.mxu0 0.0
    %514 = vmatpush1.msra.mxu0 0.0
    %515 = vmatprep.subr.mxu0 0.0
    %516 = vmatpush1.msra.mxu0 0.0
    %517 = vmatprep.subr.mxu0 0.0
    %518 = vmatpush1.msra.mxu0 0.0
    %519 = vmatprep.subr.mxu0 0.0
    %520 = vmatpush1.msra.mxu0 0.0
    %521 = vmatprep.subr.mxu0 0.0
    %522 = vmatpush1.msra.mxu0 0.0
    %523 = vmatprep.subr.mxu0 0.0
    %524 = vmatpush1.msra.mxu0 0.0
    %525 = vmatprep.subr.mxu0 0.0
    %526 = vmatpush1.msra.mxu0 0.0
    %527 = vmatprep.subr.mxu0 0.0
    %528 = vmatpush1.msra.mxu0 0.0
    %529 = vmatprep.subr.mxu0 0.0
    %530 = vmatpush1.msra.mxu0 0.0
    %531 = vmatprep.subr.mxu0 0.0
    %532 = vmatpush1.msra.mxu0 0.0
    %533 = vmatprep.subr.mxu0 0.0
    %534 = vmatpush1.msra.mxu0 0.0
    %535 = vmatprep.subr.mxu0 0.0
    %536 = vmatpush1.msra.mxu0 0.0
    %537 = vmatprep.subr.mxu0 0.0
    %538 = vmatpush1.msra.mxu0 0.0
    %539 = vmatprep.subr.mxu0 0.0
    %540 = vmatpush1.msra.mxu0 0.0
    %541 = vmatprep.subr.mxu0 0.0
    %542 = vmatpush1.msra.mxu0 0.0
    %543 = vmatprep.subr.mxu0 0.0
    %544 = vmatpush1.msra.mxu0 0.0
    %545 = vmatprep.subr.mxu0 0.0
    %546 = vmatpush1.msra.mxu0 0.0
    %547 = vmatprep.subr.mxu0 0.0
    %548 = vmatpush1.msra.mxu0 0.0
    %549 = vmatprep.subr.mxu0 0.0
    %550 = vmatpush1.msra.mxu0 0.0
    %551 = vmatprep.subr.mxu0 0.0
    %552 = vmatpush1.msra.mxu0 0.0
    %553 = vmatprep.subr.mxu0 0.0
    %554 = vmatpush1.msra.mxu0 0.0
    %555 = vmatprep.subr.mxu0 0.0
    %556 = vmatpush1.msra.mxu0 0.0
    %557 = vmatprep.subr.mxu0 0.0
    %558 = vmatpush1.msra.mxu0 0.0
    %559 = vmatprep.subr.mxu0 0.0
    %560 = vmatpush1.msra.mxu0 0.0
    %561 = vmatprep.mubr.f32.mxu0 0.0
    %562 = vmatmul.mubr.f32.gmra.mrb[0].mxu0 %v495
    %v563 = vpop.f32.mrb[0].mxu0
    %v564 = vadd.f32 0.0, %v563
    %v565 = vpop.f32.mrb[0].mxu0
    %566 = vdwg.mxu0
    %568 = vrot.lane.b32.xlu0 %v564, 64
    %v569 = vpop.permute.xlu0 %568
    %v571 = vadd.f32 %v403, %v569
    %v572 = vxor.u32 %v491, 2147483648
    %v573 = vmul.f32 %v572, 1.442695
    %v574 = vpow.pop %v573
    %v575 = vadd.f32 %v574, 1.0
    %v576 = vrcp.pop %v575
    %v577 = vmul.f32 1.0, %v576
    %v578 = vtanh.pop %v491
    %v579 = vmul.f32 %v577, %v373
    %581 = vrot.lane.b32.xlu0 %v578, 80
    %v582 = vpop.permute.xlu0 %581
    %v584 = vmul.f32 %v577, %v582
    %586 = vrot.lane.b32.xlu0 %v584, 16
    %v587 = vpop.permute.xlu0 %586
    %v589 = vadd.f32 %v579, %v587
    %v590 = vtanh.pop %v589
    %592 = vrot.lane.b32.xlu0 %v590, 16
    %v593 = vpop.permute.xlu0 %592
    %v595 = vmul.f32 %v577, %v593
    %v596 = vsel %vm409, %v595, %v372
    %v597 = vsel %vm409, %v589, %v373
    %v598 = vxor.u32 %v571, 2147483648
    %v599 = vmul.f32 %v598, 1.442695
    %v600 = vpow.pop %v599
    %v601 = vadd.f32 %v600, 1.0
    %v602 = vrcp.pop %v601
    %v603 = vmul.f32 1.0, %v602
    %v604 = vtanh.pop %v571
    %v605 = vmul.f32 %v603, %v399
    %607 = vrot.lane.b32.xlu0 %v604, 80
    %v608 = vpop.permute.xlu0 %607
    %v610 = vmul.f32 %v603, %v608
    %612 = vrot.lane.b32.xlu0 %v610, 16
    %v613 = vpop.permute.xlu0 %612
    %v615 = vadd.f32 %v605, %v613
    %v616 = vtanh.pop %v615
    %618 = vrot.lane.b32.xlu0 %v616, 16
    %v619 = vpop.permute.xlu0 %618
    %v621 = vmul.f32 %v603, %v619
    %v622 = vsel %vm415, %v621, %v398
    %v623 = vsel %vm415, %v615, %v399
    %s624 = scalar_lea.vmem [#allocation2], 16
    %v625 = vld [vmem:[%s624] sm:$0xff]
    %s626 = scalar_lea.vmem [#allocation2], 40
    %v627 = vld [vmem:[%s626] sm:$0xff]
    %vm628 = vcmp.gt.s32.totalorder %v179, 2
    %v629 = vsel %vm628, 1, 0
    %630 = vset.pattern.permute.xlu0 0
    %631 = vperm.xlu0 %630, %v629
    %v632 = vpop.permute.xlu0 %631
    %vm633 = vcmp.eq.s32.totalorder %v632, 1
    %vm634 = vcmp.gt.s32.totalorder %v179, 5
    %v635 = vsel %vm634, 1, 0
    %636 = vset.pattern.permute.xlu0 0
    %637 = vperm.xlu0 %636, %v635
    %v638 = vpop.permute.xlu0 %637
    %vm639 = vcmp.eq.s32.totalorder %v638, 1
    %641 = vrot.lane.b32.xlu0 %v596, 96
    %v642 = vpop.permute.xlu0 %641
    %v643 = vsel %vm41, %v642, 0
    %645 = vmatprep.subr.mxu0 0.0
    %646 = vmatpush1.msra.mxu0 %v180
    %647 = vmatprep.subr.mxu0 0.0
    %648 = vmatpush1.msra.mxu0 %v181
    %649 = vmatprep.subr.mxu0 0.0
    %650 = vmatpush1.msra.mxu0 0.0
    %651 = vmatprep.subr.mxu0 0.0
    %652 = vmatpush1.msra.mxu0 0.0
    %653 = vmatprep.subr.mxu0 0.0
    %654 = vmatpush1.msra.mxu0 0.0
    %655 = vmatprep.subr.mxu0 0.0
    %656 = vmatpush1.msra.mxu0 0.0
    %657 = vmatprep.subr.mxu0 0.0
    %658 = vmatpush1.msra.mxu0 0.0
    %659 = vmatprep.subr.mxu0 0.0
    %660 = vmatpush1.msra.mxu0 0.0
    %661 = vmatprep.subr.mxu0 0.0
    %662 = vmatpush1.msra.mxu0 0.0
    %663 = vmatprep.subr.mxu0 0.0
    %664 = vmatpush1.msra.mxu0 0.0
    %665 = vmatprep.subr.mxu0 0.0
    %666 = vmatpush1.msra.mxu0 0.0
    %667 = vmatprep.subr.mxu0 0.0
    %668 = vmatpush1.msra.mxu0 0.0
    %669 = vmatprep.subr.mxu0 0.0
    %670 = vmatpush1.msra.mxu0 0.0
    %671 = vmatprep.subr.mxu0 0.0
    %672 = vmatpush1.msra.mxu0 0.0
    %673 = vmatprep.subr.mxu0 0.0
    %674 = vmatpush1.msra.mxu0 0.0
    %675 = vmatprep.subr.mxu0 0.0
    %676 = vmatpush1.msra.mxu0 0.0
    %677 = vmatprep.subr.mxu0 0.0
    %678 = vmatpush1.msra.mxu0 0.0
    %679 = vmatprep.subr.mxu0 0.0
    %680 = vmatpush1.msra.mxu0 0.0
    %681 = vmatprep.subr.mxu0 0.0
    %682 = vmatpush1.msra.mxu0 0.0
    %683 = vmatprep.subr.mxu0 0.0
    %684 = vmatpush1.msra.mxu0 0.0
    %685 = vmatprep.subr.mxu0 0.0
    %686 = vmatpush1.msra.mxu0 0.0
    %687 = vmatprep.subr.mxu0 0.0
    %688 = vmatpush1.msra.mxu0 0.0
    %689 = vmatprep.subr.mxu0 0.0
    %690 = vmatpush1.msra.mxu0 0.0
    %691 = vmatprep.subr.mxu0 0.0
    %692 = vmatpush1.msra.mxu0 0.0
    %693 = vmatprep.subr.mxu0 0.0
    %694 = vmatpush1.msra.mxu0 0.0
    %695 = vmatprep.subr.mxu0 0.0
    %696 = vmatpush1.msra.mxu0 0.0
    %697 = vmatprep.subr.mxu0 0.0
    %698 = vmatpush1.msra.mxu0 0.0
    %699 = vmatprep.subr.mxu0 0.0
    %700 = vmatpush1.msra.mxu0 0.0
    %701 = vmatprep.subr.mxu0 0.0
    %702 = vmatpush1.msra.mxu0 0.0
    %703 = vmatprep.subr.mxu0 0.0
    %704 = vmatpush1.msra.mxu0 0.0
    %705 = vmatprep.subr.mxu0 0.0
    %706 = vmatpush1.msra.mxu0 0.0
    %707 = vmatprep.subr.mxu0 0.0
    %708 = vmatpush1.msra.mxu0 0.0
    %709 = vmatprep.mubr.f32.mxu0 0.0
    %710 = vmatmul.mubr.f32.gmra.mrb[0].mxu0 %v643
    %v711 = vpop.f32.mrb[0].mxu0
    %v712 = vadd.f32 0.0, %v711
    %v713 = vpop.f32.mrb[0].mxu0
    %714 = vdwg.mxu0
    %v715 = vadd.f32 %v625, %v712
    %717 = vrot.lane.b32.xlu0 %v622, 32
    %v718 = vpop.permute.xlu0 %717
    %v719 = vsel %vm41, %v718, 0
    %721 = vmatprep.subr.mxu0 0.0
    %722 = vmatpush1.msra.mxu0 %v182
    %723 = vmatprep.subr.mxu0 0.0
    %724 = vmatpush1.msra.mxu0 %v183
    %725 = vmatprep.subr.mxu0 0.0
    %726 = vmatpush1.msra.mxu0 0.0
    %727 = vmatprep.subr.mxu0 0.0
    %728 = vmatpush1.msra.mxu0 0.0
    %729 = vmatprep.subr.mxu0 0.0
    %730 = vmatpush1.msra.mxu0 0.0
    %731 = vmatprep.subr.mxu0 0.0
    %732 = vmatpush1.msra.mxu0 0.0
    %733 = vmatprep.subr.mxu0 0.0
    %734 = vmatpush1.msra.mxu0 0.0
    %735 = vmatprep.subr.mxu0 0.0
    %736 = vmatpush1.msra.mxu0 0.0
    %737 = vmatprep.subr.mxu0 0.0
    %738 = vmatpush1.msra.mxu0 0.0
    %739 = vmatprep.subr.mxu0 0.0
    %740 = vmatpush1.msra.mxu0 0.0
    %741 = vmatprep.subr.mxu0 0.0
    %742 = vmatpush1.msra.mxu0 0.0
    %743 = vmatprep.subr.mxu0 0.0
    %744 = vmatpush1.msra.mxu0 0.0
    %745 = vmatprep.subr.mxu0 0.0
    %746 = vmatpush1.msra.mxu0 0.0
    %747 = vmatprep.subr.mxu0 0.0
    %748 = vmatpush1.msra.mxu0 0.0
    %749 = vmatprep.subr.mxu0 0.0
    %750 = vmatpush1.msra.mxu0 0.0
    %751 = vmatprep.subr.mxu0 0.0
    %752 = vmatpush1.msra.mxu0 0.0
    %753 = vmatprep.subr.mxu0 0.0
    %754 = vmatpush1.msra.mxu0 0.0
    %755 = vmatprep.subr.mxu0 0.0
    %756 = vmatpush1.msra.mxu0 0.0
    %757 = vmatprep.subr.mxu0 0.0
    %758 = vmatpush1.msra.mxu0 0.0
    %759 = vmatprep.subr.mxu0 0.0
    %760 = vmatpush1.msra.mxu0 0.0
    %761 = vmatprep.subr.mxu0 0.0
    %762 = vmatpush1.msra.mxu0 0.0
    %763 = vmatprep.subr.mxu0 0.0
    %764 = vmatpush1.msra.mxu0 0.0
    %765 = vmatprep.subr.mxu0 0.0
    %766 = vmatpush1.msra.mxu0 0.0
    %767 = vmatprep.subr.mxu0 0.0
    %768 = vmatpush1.msra.mxu0 0.0
    %769 = vmatprep.subr.mxu0 0.0
    %770 = vmatpush1.msra.mxu0 0.0
    %771 = vmatprep.subr.mxu0 0.0
    %772 = vmatpush1.msra.mxu0 0.0
    %773 = vmatprep.subr.mxu0 0.0
    %774 = vmatpush1.msra.mxu0 0.0
    %775 = vmatprep.subr.mxu0 0.0
    %776 = vmatpush1.msra.mxu0 0.0
    %777 = vmatprep.subr.mxu0 0.0
    %778 = vmatpush1.msra.mxu0 0.0
    %779 = vmatprep.subr.mxu0 0.0
    %780 = vmatpush1.msra.mxu0 0.0
    %781 = vmatprep.subr.mxu0 0.0
    %782 = vmatpush1.msra.mxu0 0.0
    %783 = vmatprep.subr.mxu0 0.0
    %784 = vmatpush1.msra.mxu0 0.0
    %785 = vmatprep.mubr.f32.mxu0 0.0
    %786 = vmatmul.mubr.f32.gmra.mrb[0].mxu0 %v719
    %v787 = vpop.f32.mrb[0].mxu0
    %v788 = vadd.f32 0.0, %v787
    %v789 = vpop.f32.mrb[0].mxu0
    %790 = vdwg.mxu0
    %792 = vrot.lane.b32.xlu0 %v788, 64
    %v793 = vpop.permute.xlu0 %792
    %v795 = vadd.f32 %v627, %v793
    %v796 = vxor.u32 %v715, 2147483648
    %v797 = vmul.f32 %v796, 1.442695
    %v798 = vpow.pop %v797
    %v799 = vadd.f32 %v798, 1.0
    %v800 = vrcp.pop %v799
    %v801 = vmul.f32 1.0, %v800
    %v802 = vtanh.pop %v715
    %v803 = vmul.f32 %v801, %v597
    %805 = vrot.lane.b32.xlu0 %v802, 80
    %v806 = vpop.permute.xlu0 %805
    %v808 = vmul.f32 %v801, %v806
    %810 = vrot.lane.b32.xlu0 %v808, 16
    %v811 = vpop.permute.xlu0 %810
    %v813 = vadd.f32 %v803, %v811
    %v814 = vtanh.pop %v813
    %816 = vrot.lane.b32.xlu0 %v814, 16
    %v817 = vpop.permute.xlu0 %816
    %v819 = vmul.f32 %v801, %v817
    %v820 = vsel %vm633, %v819, %v596
    %v821 = vsel %vm633, %v813, %v597
    %v822 = vxor.u32 %v795, 2147483648
    %v823 = vmul.f32 %v822, 1.442695
    %v824 = vpow.pop %v823
    %v825 = vadd.f32 %v824, 1.0
    %v826 = vrcp.pop %v825
    %v827 = vmul.f32 1.0, %v826
    %v828 = vtanh.pop %v795
    %v829 = vmul.f32 %v827, %v623
    %831 = vrot.lane.b32.xlu0 %v828, 80
    %v832 = vpop.permute.xlu0 %831
    %v834 = vmul.f32 %v827, %v832
    %836 = vrot.lane.b32.xlu0 %v834, 16
    %v837 = vpop.permute.xlu0 %836
    %v839 = vadd.f32 %v829, %v837
    %v840 = vtanh.pop %v839
    %842 = vrot.lane.b32.xlu0 %v840, 16
    %v843 = vpop.permute.xlu0 %842
    %v845 = vmul.f32 %v827, %v843
    %v846 = vsel %vm639, %v845, %v622
    %v847 = vsel %vm639, %v839, %v623
    %s848 = scalar_lea.vmem [#allocation2], 24
    %v849 = vld [vmem:[%s848] sm:$0xff]
    %s850 = scalar_lea.vmem [#allocation2], 32
    %v851 = vld [vmem:[%s850] sm:$0xff]
    %vm852 = vcmp.gt.s32.totalorder %v179, 3
    %v853 = vsel %vm852, 1, 0
    %854 = vset.pattern.permute.xlu0 0
    %855 = vperm.xlu0 %854, %v853
    %v856 = vpop.permute.xlu0 %855
    %vm857 = vcmp.eq.s32.totalorder %v856, 1
    %vm858 = vcmp.gt.s32.totalorder %v179, 4
    %v859 = vsel %vm858, 1, 0
    %860 = vset.pattern.permute.xlu0 0
    %861 = vperm.xlu0 %860, %v859
    %v862 = vpop.permute.xlu0 %861
    %vm863 = vcmp.eq.s32.totalorder %v862, 1
    %865 = vrot.lane.b32.xlu0 %v820, 96
    %v866 = vpop.permute.xlu0 %865
    %v867 = vsel %vm41, %v866, 0
    %869 = vmatprep.subr.mxu0 0.0
    %870 = vmatpush1.msra.mxu0 %v180
    %871 = vmatprep.subr.mxu0 0.0
    %872 = vmatpush1.msra.mxu0 %v181
    %873 = vmatprep.subr.mxu0 0.0
    %874 = vmatpush1.msra.mxu0 0.0
    %875 = vmatprep.subr.mxu0 0.0
    %876 = vmatpush1.msra.mxu0 0.0
    %877 = vmatprep.subr.mxu0 0.0
    %878 = vmatpush1.msra.mxu0 0.0
    %879 = vmatprep.subr.mxu0 0.0
    %880 = vmatpush1.msra.mxu0 0.0
    %881 = vmatprep.subr.mxu0 0.0
    %882 = vmatpush1.msra.mxu0 0.0
    %883 = vmatprep.subr.mxu0 0.0
    %884 = vmatpush1.msra.mxu0 0.0
    %885 = vmatprep.subr.mxu0 0.0
    %886 = vmatpush1.msra.mxu0 0.0
    %887 = vmatprep.subr.mxu0 0.0
    %888 = vmatpush1.msra.mxu0 0.0
    %889 = vmatprep.subr.mxu0 0.0
    %890 = vmatpush1.msra.mxu0 0.0
    %891 = vmatprep.subr.mxu0 0.0
    %892 = vmatpush1.msra.mxu0 0.0
    %893 = vmatprep.subr.mxu0 0.0
    %894 = vmatpush1.msra.mxu0 0.0
    %895 = vmatprep.subr.mxu0 0.0
    %896 = vmatpush1.msra.mxu0 0.0
    %897 = vmatprep.subr.mxu0 0.0
    %898 = vmatpush1.msra.mxu0 0.0
    %899 = vmatprep.subr.mxu0 0.0
    %900 = vmatpush1.msra.mxu0 0.0
    %901 = vmatprep.subr.mxu0 0.0
    %902 = vmatpush1.msra.mxu0 0.0
    %903 = vmatprep.subr.mxu0 0.0
    %904 = vmatpush1.msra.mxu0 0.0
    %905 = vmatprep.subr.mxu0 0.0
    %906 = vmatpush1.msra.mxu0 0.0
    %907 = vmatprep.subr.mxu0 0.0
    %908 = vmatpush1.msra.mxu0 0.0
    %909 = vmatprep.subr.mxu0 0.0
    %910 = vmatpush1.msra.mxu0 0.0
    %911 = vmatprep.subr.mxu0 0.0
    %912 = vmatpush1.msra.mxu0 0.0
    %913 = vmatprep.subr.mxu0 0.0
    %914 = vmatpush1.msra.mxu0 0.0
    %915 = vmatprep.subr.mxu0 0.0
    %916 = vmatpush1.msra.mxu0 0.0
    %917 = vmatprep.subr.mxu0 0.0
    %918 = vmatpush1.msra.mxu0 0.0
    %919 = vmatprep.subr.mxu0 0.0
    %920 = vmatpush1.msra.mxu0 0.0
    %921 = vmatprep.subr.mxu0 0.0
    %922 = vmatpush1.msra.mxu0 0.0
    %923 = vmatprep.subr.mxu0 0.0
    %924 = vmatpush1.msra.mxu0 0.0
    %925 = vmatprep.subr.mxu0 0.0
    %926 = vmatpush1.msra.mxu0 0.0
    %927 = vmatprep.subr.mxu0 0.0
    %928 = vmatpush1.msra.mxu0 0.0
    %929 = vmatprep.subr.mxu0 0.0
    %930 = vmatpush1.msra.mxu0 0.0
    %931 = vmatprep.subr.mxu0 0.0
    %932 = vmatpush1.msra.mxu0 0.0
    %933 = vmatprep.mubr.f32.mxu0 0.0
    %934 = vmatmul.mubr.f32.gmra.mrb[0].mxu0 %v867
    %v935 = vpop.f32.mrb[0].mxu0
    %v936 = vadd.f32 0.0, %v935
    %v937 = vpop.f32.mrb[0].mxu0
    %938 = vdwg.mxu0
    %v939 = vadd.f32 %v849, %v936
    %941 = vrot.lane.b32.xlu0 %v846, 32
    %v942 = vpop.permute.xlu0 %941
    %v943 = vsel %vm41, %v942, 0
    %945 = vmatprep.subr.mxu0 0.0
    %946 = vmatpush1.msra.mxu0 %v182
    %947 = vmatprep.subr.mxu0 0.0
    %948 = vmatpush1.msra.mxu0 %v183
    %949 = vmatprep.subr.mxu0 0.0
    %950 = vmatpush1.msra.mxu0 0.0
    %951 = vmatprep.subr.mxu0 0.0
    %952 = vmatpush1.msra.mxu0 0.0
    %953 = vmatprep.subr.mxu0 0.0
    %954 = vmatpush1.msra.mxu0 0.0
    %955 = vmatprep.subr.mxu0 0.0
    %956 = vmatpush1.msra.mxu0 0.0
    %957 = vmatprep.subr.mxu0 0.0
    %958 = vmatpush1.msra.mxu0 0.0
    %959 = vmatprep.subr.mxu0 0.0
    %960 = vmatpush1.msra.mxu0 0.0
    %961 = vmatprep.subr.mxu0 0.0
    %962 = vmatpush1.msra.mxu0 0.0
    %963 = vmatprep.subr.mxu0 0.0
    %964 = vmatpush1.msra.mxu0 0.0
    %965 = vmatprep.subr.mxu0 0.0
    %966 = vmatpush1.msra.mxu0 0.0
    %967 = vmatprep.subr.mxu0 0.0
    %968 = vmatpush1.msra.mxu0 0.0
    %969 = vmatprep.subr.mxu0 0.0
    %970 = vmatpush1.msra.mxu0 0.0
    %971 = vmatprep.subr.mxu0 0.0
    %972 = vmatpush1.msra.mxu0 0.0
    %973 = vmatprep.subr.mxu0 0.0
    %974 = vmatpush1.msra.mxu0 0.0
    %975 = vmatprep.subr.mxu0 0.0
    %976 = vmatpush1.msra.mxu0 0.0
    %977 = vmatprep.subr.mxu0 0.0
    %978 = vmatpush1.msra.mxu0 0.0
    %979 = vmatprep.subr.mxu0 0.0
    %980 = vmatpush1.msra.mxu0 0.0
    %981 = vmatprep.subr.mxu0 0.0
    %982 = vmatpush1.msra.mxu0 0.0
    %983 = vmatprep.subr.mxu0 0.0
    %984 = vmatpush1.msra.mxu0 0.0
    %985 = vmatprep.subr.mxu0 0.0
    %986 = vmatpush1.msra.mxu0 0.0
    %987 = vmatprep.subr.mxu0 0.0
    %988 = vmatpush1.msra.mxu0 0.0
    %989 = vmatprep.subr.mxu0 0.0
    %990 = vmatpush1.msra.mxu0 0.0
    %991 = vmatprep.subr.mxu0 0.0
    %992 = vmatpush1.msra.mxu0 0.0
    %993 = vmatprep.subr.mxu0 0.0
    %994 = vmatpush1.msra.mxu0 0.0
    %995 = vmatprep.subr.mxu0 0.0
    %996 = vmatpush1.msra.mxu0 0.0
    %997 = vmatprep.subr.mxu0 0.0
    %998 = vmatpush1.msra.mxu0 0.0
    %999 = vmatprep.subr.mxu0 0.0
    %1000 = vmatpush1.msra.mxu0 0.0
    %1001 = vmatprep.subr.mxu0 0.0
    %1002 = vmatpush1.msra.mxu0 0.0
    %1003 = vmatprep.subr.mxu0 0.0
    %1004 = vmatpush1.msra.mxu0 0.0
    %1005 = vmatprep.subr.mxu0 0.0
    %1006 = vmatpush1.msra.mxu0 0.0
    %1007 = vmatprep.subr.mxu0 0.0
    %1008 = vmatpush1.msra.mxu0 0.0
    %1009 = vmatprep.mubr.f32.mxu0 0.0
    %1010 = vmatmul.mubr.f32.gmra.mrb[0].mxu0 %v943
    %v1011 = vpop.f32.mrb[0].mxu0
    %v1012 = vadd.f32 0.0, %v1011
    %v1013 = vpop.f32.mrb[0].mxu0
    %1014 = vdwg.mxu0
    %1016 = vrot.lane.b32.xlu0 %v1012, 64
    %v1017 = vpop.permute.xlu0 %1016
    %v1019 = vadd.f32 %v851, %v1017
    %v1020 = vxor.u32 %v939, 2147483648
    %v1021 = vmul.f32 %v1020, 1.442695
    %v1022 = vpow.pop %v1021
    %v1023 = vadd.f32 %v1022, 1.0
    %v1024 = vrcp.pop %v1023
    %v1025 = vmul.f32 1.0, %v1024
    %v1026 = vtanh.pop %v939
    %v1027 = vmul.f32 %v1025, %v821
    %1029 = vrot.lane.b32.xlu0 %v1026, 80
    %v1030 = vpop.permute.xlu0 %1029
    %v1032 = vmul.f32 %v1025, %v1030
    %1034 = vrot.lane.b32.xlu0 %v1032, 16
    %v1035 = vpop.permute.xlu0 %1034
    %v1037 = vadd.f32 %v1027, %v1035
    %v1038 = vtanh.pop %v1037
    %1040 = vrot.lane.b32.xlu0 %v1038, 16
    %v1041 = vpop.permute.xlu0 %1040
    %v1043 = vmul.f32 %v1025, %v1041
    %v1044 = vsel %vm857, %v1043, %v820
    %v1045 = vsel %vm857, %v1037, %v821
    %v1046 = vxor.u32 %v1019, 2147483648
    %v1047 = vmul.f32 %v1046, 1.442695
    %v1048 = vpow.pop %v1047
    %v1049 = vadd.f32 %v1048, 1.0
    %v1050 = vrcp.pop %v1049
    %v1051 = vmul.f32 1.0, %v1050
    %v1052 = vtanh.pop %v1019
    %v1053 = vmul.f32 %v1051, %v847
    %1055 = vrot.lane.b32.xlu0 %v1052, 80
    %v1056 = vpop.permute.xlu0 %1055
    %v1058 = vmul.f32 %v1051, %v1056
    %1060 = vrot.lane.b32.xlu0 %v1058, 16
    %v1061 = vpop.permute.xlu0 %1060
    %v1063 = vadd.f32 %v1053, %v1061
    %v1064 = vtanh.pop %v1063
    %1066 = vrot.lane.b32.xlu0 %v1064, 16
    %v1067 = vpop.permute.xlu0 %1066
    %v1069 = vmul.f32 %v1051, %v1067
    %v1070 = vsel %vm863, %v1069, %v846
    %v1071 = vsel %vm863, %v1063, %v847
    %1073 = vrot.lane.b32.xlu0 %v1044, 96
    %v1074 = vpop.permute.xlu0 %1073
    %v1075 = vsel %vm41, %v1074, 0
    %1077 = vmatprep.subr.mxu0 0.0
    %1078 = vmatpush1.msra.mxu0 %v180
    %1079 = vmatprep.subr.mxu0 0.0
    %1080 = vmatpush1.msra.mxu0 %v181
    %1081 = vmatprep.subr.mxu0 0.0
    %1082 = vmatpush1.msra.mxu0 0.0
    %1083 = vmatprep.subr.mxu0 0.0
    %1084 = vmatpush1.msra.mxu0 0.0
    %1085 = vmatprep.subr.mxu0 0.0
    %1086 = vmatpush1.msra.mxu0 0.0
    %1087 = vmatprep.subr.mxu0 0.0
    %1088 = vmatpush1.msra.mxu0 0.0
    %1089 = vmatprep.subr.mxu0 0.0
    %1090 = vmatpush1.msra.mxu0 0.0
    %1091 = vmatprep.subr.mxu0 0.0
    %1092 = vmatpush1.msra.mxu0 0.0
    %1093 = vmatprep.subr.mxu0 0.0
    %1094 = vmatpush1.msra.mxu0 0.0
    %1095 = vmatprep.subr.mxu0 0.0
    %1096 = vmatpush1.msra.mxu0 0.0
    %1097 = vmatprep.subr.mxu0 0.0
    %1098 = vmatpush1.msra.mxu0 0.0
    %1099 = vmatprep.subr.mxu0 0.0
    %1100 = vmatpush1.msra.mxu0 0.0
    %1101 = vmatprep.subr.mxu0 0.0
    %1102 = vmatpush1.msra.mxu0 0.0
    %1103 = vmatprep.subr.mxu0 0.0
    %1104 = vmatpush1.msra.mxu0 0.0
    %1105 = vmatprep.subr.mxu0 0.0
    %1106 = vmatpush1.msra.mxu0 0.0
    %1107 = vmatprep.subr.mxu0 0.0
    %1108 = vmatpush1.msra.mxu0 0.0
    %1109 = vmatprep.subr.mxu0 0.0
    %1110 = vmatpush1.msra.mxu0 0.0
    %1111 = vmatprep.subr.mxu0 0.0
    %1112 = vmatpush1.msra.mxu0 0.0
    %1113 = vmatprep.subr.mxu0 0.0
    %1114 = vmatpush1.msra.mxu0 0.0
    %1115 = vmatprep.subr.mxu0 0.0
    %1116 = vmatpush1.msra.mxu0 0.0
    %1117 = vmatprep.subr.mxu0 0.0
    %1118 = vmatpush1.msra.mxu0 0.0
    %1119 = vmatprep.subr.mxu0 0.0
    %1120 = vmatpush1.msra.mxu0 0.0
    %1121 = vmatprep.subr.mxu0 0.0
    %1122 = vmatpush1.msra.mxu0 0.0
    %1123 = vmatprep.subr.mxu0 0.0
    %1124 = vmatpush1.msra.mxu0 0.0
    %1125 = vmatprep.subr.mxu0 0.0
    %1126 = vmatpush1.msra.mxu0 0.0
    %1127 = vmatprep.subr.mxu0 0.0
    %1128 = vmatpush1.msra.mxu0 0.0
    %1129 = vmatprep.subr.mxu0 0.0
    %1130 = vmatpush1.msra.mxu0 0.0
    %1131 = vmatprep.subr.mxu0 0.0
    %1132 = vmatpush1.msra.mxu0 0.0
    %1133 = vmatprep.subr.mxu0 0.0
    %1134 = vmatpush1.msra.mxu0 0.0
    %1135 = vmatprep.subr.mxu0 0.0
    %1136 = vmatpush1.msra.mxu0 0.0
    %1137 = vmatprep.subr.mxu0 0.0
    %1138 = vmatpush1.msra.mxu0 0.0
    %1139 = vmatprep.subr.mxu0 0.0
    %1140 = vmatpush1.msra.mxu0 0.0
    %1141 = vmatprep.mubr.f32.mxu0 0.0
    %1142 = vmatmul.mubr.f32.gmra.mrb[0].mxu0 %v1075
    %v1143 = vpop.f32.mrb[0].mxu0
    %v1144 = vadd.f32 0.0, %v1143
    %v1145 = vpop.f32.mrb[0].mxu0
    %1146 = vdwg.mxu0
    %v1147 = vadd.f32 %v851, %v1144
    %1149 = vrot.lane.b32.xlu0 %v1070, 32
    %v1150 = vpop.permute.xlu0 %1149
    %v1151 = vsel %vm41, %v1150, 0
    %1153 = vmatprep.subr.mxu0 0.0
    %1154 = vmatpush1.msra.mxu0 %v182
    %1155 = vmatprep.subr.mxu0 0.0
    %1156 = vmatpush1.msra.mxu0 %v183
    %1157 = vmatprep.subr.mxu0 0.0
    %1158 = vmatpush1.msra.mxu0 0.0
    %1159 = vmatprep.subr.mxu0 0.0
    %1160 = vmatpush1.msra.mxu0 0.0
    %1161 = vmatprep.subr.mxu0 0.0
    %1162 = vmatpush1.msra.mxu0 0.0
    %1163 = vmatprep.subr.mxu0 0.0
    %1164 = vmatpush1.msra.mxu0 0.0
    %1165 = vmatprep.subr.mxu0 0.0
    %1166 = vmatpush1.msra.mxu0 0.0
    %1167 = vmatprep.subr.mxu0 0.0
    %1168 = vmatpush1.msra.mxu0 0.0
    %1169 = vmatprep.subr.mxu0 0.0
    %1170 = vmatpush1.msra.mxu0 0.0
    %1171 = vmatprep.subr.mxu0 0.0
    %1172 = vmatpush1.msra.mxu0 0.0
    %1173 = vmatprep.subr.mxu0 0.0
    %1174 = vmatpush1.msra.mxu0 0.0
    %1175 = vmatprep.subr.mxu0 0.0
    %1176 = vmatpush1.msra.mxu0 0.0
    %1177 = vmatprep.subr.mxu0 0.0
    %1178 = vmatpush1.msra.mxu0 0.0
    %1179 = vmatprep.subr.mxu0 0.0
    %1180 = vmatpush1.msra.mxu0 0.0
    %1181 = vmatprep.subr.mxu0 0.0
    %1182 = vmatpush1.msra.mxu0 0.0
    %1183 = vmatprep.subr.mxu0 0.0
    %1184 = vmatpush1.msra.mxu0 0.0
    %1185 = vmatprep.subr.mxu0 0.0
    %1186 = vmatpush1.msra.mxu0 0.0
    %1187 = vmatprep.subr.mxu0 0.0
    %1188 = vmatpush1.msra.mxu0 0.0
    %1189 = vmatprep.subr.mxu0 0.0
    %1190 = vmatpush1.msra.mxu0 0.0
    %1191 = vmatprep.subr.mxu0 0.0
    %1192 = vmatpush1.msra.mxu0 0.0
    %1193 = vmatprep.subr.mxu0 0.0
    %1194 = vmatpush1.msra.mxu0 0.0
    %1195 = vmatprep.subr.mxu0 0.0
    %1196 = vmatpush1.msra.mxu0 0.0
    %1197 = vmatprep.subr.mxu0 0.0
    %1198 = vmatpush1.msra.mxu0 0.0
    %1199 = vmatprep.subr.mxu0 0.0
    %1200 = vmatpush1.msra.mxu0 0.0
    %1201 = vmatprep.subr.mxu0 0.0
    %1202 = vmatpush1.msra.mxu0 0.0
    %1203 = vmatprep.subr.mxu0 0.0
    %1204 = vmatpush1.msra.mxu0 0.0
    %1205 = vmatprep.subr.mxu0 0.0
    %1206 = vmatpush1.msra.mxu0 0.0
    %1207 = vmatprep.subr.mxu0 0.0
    %1208 = vmatpush1.msra.mxu0 0.0
    %1209 = vmatprep.subr.mxu0 0.0
    %1210 = vmatpush1.msra.mxu0 0.0
    %1211 = vmatprep.subr.mxu0 0.0
    %1212 = vmatpush1.msra.mxu0 0.0
    %1213 = vmatprep.subr.mxu0 0.0
    %1214 = vmatpush1.msra.mxu0 0.0
    %1215 = vmatprep.subr.mxu0 0.0
    %1216 = vmatpush1.msra.mxu0 0.0
    %1217 = vmatprep.mubr.f32.mxu0 0.0
    %1218 = vmatmul.mubr.f32.gmra.mrb[0].mxu0 %v1151
    %v1219 = vpop.f32.mrb[0].mxu0
    %v1220 = vadd.f32 0.0, %v1219
    %v1221 = vpop.f32.mrb[0].mxu0
    %1222 = vdwg.mxu0
    %1224 = vrot.lane.b32.xlu0 %v1220, 64
    %v1225 = vpop.permute.xlu0 %1224
    %v1227 = vadd.f32 %v849, %v1225
    %v1228 = vxor.u32 %v1147, 2147483648
    %v1229 = vmul.f32 %v1228, 1.442695
    %v1230 = vpow.pop %v1229
    %v1231 = vadd.f32 %v1230, 1.0
    %v1232 = vrcp.pop %v1231
    %v1233 = vmul.f32 1.0, %v1232
    %v1234 = vtanh.pop %v1147
    %v1235 = vmul.f32 %v1233, %v1045
    %1237 = vrot.lane.b32.xlu0 %v1234, 80
    %v1238 = vpop.permute.xlu0 %1237
    %v1240 = vmul.f32 %v1233, %v1238
    %1242 = vrot.lane.b32.xlu0 %v1240, 16
    %v1243 = vpop.permute.xlu0 %1242
    %v1245 = vadd.f32 %v1235, %v1243
    %v1246 = vtanh.pop %v1245
    %1248 = vrot.lane.b32.xlu0 %v1246, 16
    %v1249 = vpop.permute.xlu0 %1248
    %v1251 = vmul.f32 %v1233, %v1249
    %v1252 = vsel %vm863, %v1251, %v1044
    %v1253 = vsel %vm863, %v1245, %v1045
    %v1254 = vxor.u32 %v1227, 2147483648
    %v1255 = vmul.f32 %v1254, 1.442695
    %v1256 = vpow.pop %v1255
    %v1257 = vadd.f32 %v1256, 1.0
    %v1258 = vrcp.pop %v1257
    %v1259 = vmul.f32 1.0, %v1258
    %v1260 = vtanh.pop %v1227
    %v1261 = vmul.f32 %v1259, %v1071
    %1263 = vrot.lane.b32.xlu0 %v1260, 80
    %v1264 = vpop.permute.xlu0 %1263
    %v1266 = vmul.f32 %v1259, %v1264
    %1268 = vrot.lane.b32.xlu0 %v1266, 16
    %v1269 = vpop.permute.xlu0 %1268
    %v1271 = vadd.f32 %v1261, %v1269
    %v1272 = vtanh.pop %v1271
    %1274 = vrot.lane.b32.xlu0 %v1272, 16
    %v1275 = vpop.permute.xlu0 %1274
    %v1277 = vmul.f32 %v1259, %v1275
    %v1278 = vsel %vm857, %v1277, %v1070
    %v1279 = vsel %vm857, %v1271, %v1071
    %1281 = vrot.lane.b32.xlu0 %v1252, 96
    %v1282 = vpop.permute.xlu0 %1281
    %v1283 = vsel %vm41, %v1282, 0
    %1285 = vmatprep.subr.mxu0 0.0
    %1286 = vmatpush1.msra.mxu0 %v180
    %1287 = vmatprep.subr.mxu0 0.0
    %1288 = vmatpush1.msra.mxu0 %v181
    %1289 = vmatprep.subr.mxu0 0.0
    %1290 = vmatpush1.msra.mxu0 0.0
    %1291 = vmatprep.subr.mxu0 0.0
    %1292 = vmatpush1.msra.mxu0 0.0
    %1293 = vmatprep.subr.mxu0 0.0
    %1294 = vmatpush1.msra.mxu0 0.0
    %1295 = vmatprep.subr.mxu0 0.0
    %1296 = vmatpush1.msra.mxu0 0.0
    %1297 = vmatprep.subr.mxu0 0.0
    %1298 = vmatpush1.msra.mxu0 0.0
    %1299 = vmatprep.subr.mxu0 0.0
    %1300 = vmatpush1.msra.mxu0 0.0
    %1301 = vmatprep.subr.mxu0 0.0
    %1302 = vmatpush1.msra.mxu0 0.0
    %1303 = vmatprep.subr.mxu0 0.0
    %1304 = vmatpush1.msra.mxu0 0.0
    %1305 = vmatprep.subr.mxu0 0.0
    %1306 = vmatpush1.msra.mxu0 0.0
    %1307 = vmatprep.subr.mxu0 0.0
    %1308 = vmatpush1.msra.mxu0 0.0
    %1309 = vmatprep.subr.mxu0 0.0
    %1310 = vmatpush1.msra.mxu0 0.0
    %1311 = vmatprep.subr.mxu0 0.0
    %1312 = vmatpush1.msra.mxu0 0.0
    %1313 = vmatprep.subr.mxu0 0.0
    %1314 = vmatpush1.msra.mxu0 0.0
    %1315 = vmatprep.subr.mxu0 0.0
    %1316 = vmatpush1.msra.mxu0 0.0
    %1317 = vmatprep.subr.mxu0 0.0
    %1318 = vmatpush1.msra.mxu0 0.0
    %1319 = vmatprep.subr.mxu0 0.0
    %1320 = vmatpush1.msra.mxu0 0.0
    %1321 = vmatprep.subr.mxu0 0.0
    %1322 = vmatpush1.msra.mxu0 0.0
    %1323 = vmatprep.subr.mxu0 0.0
    %1324 = vmatpush1.msra.mxu0 0.0
    %1325 = vmatprep.subr.mxu0 0.0
    %1326 = vmatpush1.msra.mxu0 0.0
    %1327 = vmatprep.subr.mxu0 0.0
    %1328 = vmatpush1.msra.mxu0 0.0
    %1329 = vmatprep.subr.mxu0 0.0
    %1330 = vmatpush1.msra.mxu0 0.0
    %1331 = vmatprep.subr.mxu0 0.0
    %1332 = vmatpush1.msra.mxu0 0.0
    %1333 = vmatprep.subr.mxu0 0.0
    %1334 = vmatpush1.msra.mxu0 0.0
    %1335 = vmatprep.subr.mxu0 0.0
    %1336 = vmatpush1.msra.mxu0 0.0
    %1337 = vmatprep.subr.mxu0 0.0
    %1338 = vmatpush1.msra.mxu0 0.0
    %1339 = vmatprep.subr.mxu0 0.0
    %1340 = vmatpush1.msra.mxu0 0.0
    %1341 = vmatprep.subr.mxu0 0.0
    %1342 = vmatpush1.msra.mxu0 0.0
    %1343 = vmatprep.subr.mxu0 0.0
    %1344 = vmatpush1.msra.mxu0 0.0
    %1345 = vmatprep.subr.mxu0 0.0
    %1346 = vmatpush1.msra.mxu0 0.0
    %1347 = vmatprep.subr.mxu0 0.0
    %1348 = vmatpush1.msra.mxu0 0.0
    %1349 = vmatprep.mubr.f32.mxu0 0.0
    %1350 = vmatmul.mubr.f32.gmra.mrb[0].mxu0 %v1283
    %v1351 = vpop.f32.mrb[0].mxu0
    %v1352 = vadd.f32 0.0, %v1351
    %v1353 = vpop.f32.mrb[0].mxu0
    %1354 = vdwg.mxu0
    %v1355 = vadd.f32 %v627, %v1352
    %1357 = vrot.lane.b32.xlu0 %v1278, 32
    %v1358 = vpop.permute.xlu0 %1357
    %v1359 = vsel %vm41, %v1358, 0
    %1361 = vmatprep.subr.mxu0 0.0
    %1362 = vmatpush1.msra.mxu0 %v182
    %1363 = vmatprep.subr.mxu0 0.0
    %1364 = vmatpush1.msra.mxu0 %v183
    %1365 = vmatprep.subr.mxu0 0.0
    %1366 = vmatpush1.msra.mxu0 0.0
    %1367 = vmatprep.subr.mxu0 0.0
    %1368 = vmatpush1.msra.mxu0 0.0
    %1369 = vmatprep.subr.mxu0 0.0
    %1370 = vmatpush1.msra.mxu0 0.0
    %1371 = vmatprep.subr.mxu0 0.0
    %1372 = vmatpush1.msra.mxu0 0.0
    %1373 = vmatprep.subr.mxu0 0.0
    %1374 = vmatpush1.msra.mxu0 0.0
    %1375 = vmatprep.subr.mxu0 0.0
    %1376 = vmatpush1.msra.mxu0 0.0
    %1377 = vmatprep.subr.mxu0 0.0
    %1378 = vmatpush1.msra.mxu0 0.0
    %1379 = vmatprep.subr.mxu0 0.0
    %1380 = vmatpush1.msra.mxu0 0.0
    %1381 = vmatprep.subr.mxu0 0.0
    %1382 = vmatpush1.msra.mxu0 0.0
    %1383 = vmatprep.subr.mxu0 0.0
    %1384 = vmatpush1.msra.mxu0 0.0
    %1385 = vmatprep.subr.mxu0 0.0
    %1386 = vmatpush1.msra.mxu0 0.0
    %1387 = vmatprep.subr.mxu0 0.0
    %1388 = vmatpush1.msra.mxu0 0.0
    %1389 = vmatprep.subr.mxu0 0.0
    %1390 = vmatpush1.msra.mxu0 0.0
    %1391 = vmatprep.subr.mxu0 0.0
    %1392 = vmatpush1.msra.mxu0 0.0
    %1393 = vmatprep.subr.mxu0 0.0
    %1394 = vmatpush1.msra.mxu0 0.0
    %1395 = vmatprep.subr.mxu0 0.0
    %1396 = vmatpush1.msra.mxu0 0.0
    %1397 = vmatprep.subr.mxu0 0.0
    %1398 = vmatpush1.msra.mxu0 0.0
    %1399 = vmatprep.subr.mxu0 0.0
    %1400 = vmatpush1.msra.mxu0 0.0
    %1401 = vmatprep.subr.mxu0 0.0
    %1402 = vmatpush1.msra.mxu0 0.0
    %1403 = vmatprep.subr.mxu0 0.0
    %1404 = vmatpush1.msra.mxu0 0.0
    %1405 = vmatprep.subr.mxu0 0.0
    %1406 = vmatpush1.msra.mxu0 0.0
    %1407 = vmatprep.subr.mxu0 0.0
    %1408 = vmatpush1.msra.mxu0 0.0
    %1409 = vmatprep.subr.mxu0 0.0
    %1410 = vmatpush1.msra.mxu0 0.0
    %1411 = vmatprep.subr.mxu0 0.0
    %1412 = vmatpush1.msra.mxu0 0.0
    %1413 = vmatprep.subr.mxu0 0.0
    %1414 = vmatpush1.msra.mxu0 0.0
    %1415 = vmatprep.subr.mxu0 0.0
    %1416 = vmatpush1.msra.mxu0 0.0
    %1417 = vmatprep.subr.mxu0 0.0
    %1418 = vmatpush1.msra.mxu0 0.0
    %1419 = vmatprep.subr.mxu0 0.0
    %1420 = vmatpush1.msra.mxu0 0.0
    %1421 = vmatprep.subr.mxu0 0.0
    %1422 = vmatpush1.msra.mxu0 0.0
    %1423 = vmatprep.subr.mxu0 0.0
    %1424 = vmatpush1.msra.mxu0 0.0
    %1425 = vmatprep.mubr.f32.mxu0 0.0
    %1426 = vmatmul.mubr.f32.gmra.mrb[0].mxu0 %v1359
    %v1427 = vpop.f32.mrb[0].mxu0
    %v1428 = vadd.f32 0.0, %v1427
    %v1429 = vpop.f32.mrb[0].mxu0
    %1430 = vdwg.mxu0
    %1432 = vrot.lane.b32.xlu0 %v1428, 64
    %v1433 = vpop.permute.xlu0 %1432
    %v1435 = vadd.f32 %v625, %v1433
    %v1436 = vxor.u32 %v1355, 2147483648
    %v1437 = vmul.f32 %v1436, 1.442695
    %v1438 = vpow.pop %v1437
    %v1439 = vadd.f32 %v1438, 1.0
    %v1440 = vrcp.pop %v1439
    %v1441 = vmul.f32 1.0, %v1440
    %v1442 = vtanh.pop %v1355
    %v1443 = vmul.f32 %v1441, %v1253
    %1445 = vrot.lane.b32.xlu0 %v1442, 80
    %v1446 = vpop.permute.xlu0 %1445
    %v1448 = vmul.f32 %v1441, %v1446
    %1450 = vrot.lane.b32.xlu0 %v1448, 16
    %v1451 = vpop.permute.xlu0 %1450
    %v1453 = vadd.f32 %v1443, %v1451
    %v1454 = vtanh.pop %v1453
    %1456 = vrot.lane.b32.xlu0 %v1454, 16
    %v1457 = vpop.permute.xlu0 %1456
    %v1459 = vmul.f32 %v1441, %v1457
    %v1460 = vsel %vm639, %v1459, %v1252
    %v1461 = vsel %vm639, %v1453, %v1253
    %v1462 = vxor.u32 %v1435, 2147483648
    %v1463 = vmul.f32 %v1462, 1.442695
    %v1464 = vpow.pop %v1463
    %v1465 = vadd.f32 %v1464, 1.0
    %v1466 = vrcp.pop %v1465
    %v1467 = vmul.f32 1.0, %v1466
    %v1468 = vtanh.pop %v1435
    %v1469 = vmul.f32 %v1467, %v1279
    %1471 = vrot.lane.b32.xlu0 %v1468, 80
    %v1472 = vpop.permute.xlu0 %1471
    %v1474 = vmul.f32 %v1467, %v1472
    %1476 = vrot.lane.b32.xlu0 %v1474, 16
    %v1477 = vpop.permute.xlu0 %1476
    %v1479 = vadd.f32 %v1469, %v1477
    %v1480 = vtanh.pop %v1479
    %1482 = vrot.lane.b32.xlu0 %v1480, 16
    %v1483 = vpop.permute.xlu0 %1482
    %v1485 = vmul.f32 %v1467, %v1483
    %v1486 = vsel %vm633, %v1485, %v1278
    %v1487 = vsel %vm633, %v1479, %v1279
    %1489 = vrot.lane.b32.xlu0 %v1460, 96
    %v1490 = vpop.permute.xlu0 %1489
    %v1491 = vsel %vm41, %v1490, 0
    %1493 = vmatprep.subr.mxu0 0.0
    %1494 = vmatpush1.msra.mxu0 %v180
    %1495 = vmatprep.subr.mxu0 0.0
    %1496 = vmatpush1.msra.mxu0 %v181
    %1497 = vmatprep.subr.mxu0 0.0
    %1498 = vmatpush1.msra.mxu0 0.0
    %1499 = vmatprep.subr.mxu0 0.0
    %1500 = vmatpush1.msra.mxu0 0.0
    %1501 = vmatprep.subr.mxu0 0.0
    %1502 = vmatpush1.msra.mxu0 0.0
    %1503 = vmatprep.subr.mxu0 0.0
    %1504 = vmatpush1.msra.mxu0 0.0
    %1505 = vmatprep.subr.mxu0 0.0
    %1506 = vmatpush1.msra.mxu0 0.0
    %1507 = vmatprep.subr.mxu0 0.0
    %1508 = vmatpush1.msra.mxu0 0.0
    %1509 = vmatprep.subr.mxu0 0.0
    %1510 = vmatpush1.msra.mxu0 0.0
    %1511 = vmatprep.subr.mxu0 0.0
    %1512 = vmatpush1.msra.mxu0 0.0
    %1513 = vmatprep.subr.mxu0 0.0
    %1514 = vmatpush1.msra.mxu0 0.0
    %1515 = vmatprep.subr.mxu0 0.0
    %1516 = vmatpush1.msra.mxu0 0.0
    %1517 = vmatprep.subr.mxu0 0.0
    %1518 = vmatpush1.msra.mxu0 0.0
    %1519 = vmatprep.subr.mxu0 0.0
    %1520 = vmatpush1.msra.mxu0 0.0
    %1521 = vmatprep.subr.mxu0 0.0
    %1522 = vmatpush1.msra.mxu0 0.0
    %1523 = vmatprep.subr.mxu0 0.0
    %1524 = vmatpush1.msra.mxu0 0.0
    %1525 = vmatprep.subr.mxu0 0.0
    %1526 = vmatpush1.msra.mxu0 0.0
    %1527 = vmatprep.subr.mxu0 0.0
    %1528 = vmatpush1.msra.mxu0 0.0
    %1529 = vmatprep.subr.mxu0 0.0
    %1530 = vmatpush1.msra.mxu0 0.0
    %1531 = vmatprep.subr.mxu0 0.0
    %1532 = vmatpush1.msra.mxu0 0.0
    %1533 = vmatprep.subr.mxu0 0.0
    %1534 = vmatpush1.msra.mxu0 0.0
    %1535 = vmatprep.subr.mxu0 0.0
    %1536 = vmatpush1.msra.mxu0 0.0
    %1537 = vmatprep.subr.mxu0 0.0
    %1538 = vmatpush1.msra.mxu0 0.0
    %1539 = vmatprep.subr.mxu0 0.0
    %1540 = vmatpush1.msra.mxu0 0.0
    %1541 = vmatprep.subr.mxu0 0.0
    %1542 = vmatpush1.msra.mxu0 0.0
    %1543 = vmatprep.subr.mxu0 0.0
    %1544 = vmatpush1.msra.mxu0 0.0
    %1545 = vmatprep.subr.mxu0 0.0
    %1546 = vmatpush1.msra.mxu0 0.0
    %1547 = vmatprep.subr.mxu0 0.0
    %1548 = vmatpush1.msra.mxu0 0.0
    %1549 = vmatprep.subr.mxu0 0.0
    %1550 = vmatpush1.msra.mxu0 0.0
    %1551 = vmatprep.subr.mxu0 0.0
    %1552 = vmatpush1.msra.mxu0 0.0
    %1553 = vmatprep.subr.mxu0 0.0
    %1554 = vmatpush1.msra.mxu0 0.0
    %1555 = vmatprep.subr.mxu0 0.0
    %1556 = vmatpush1.msra.mxu0 0.0
    %1557 = vmatprep.mubr.f32.mxu0 0.0
    %1558 = vmatmul.mubr.f32.gmra.mrb[0].mxu0 %v1491
    %v1559 = vpop.f32.mrb[0].mxu0
    %v1560 = vadd.f32 0.0, %v1559
    %v1561 = vpop.f32.mrb[0].mxu0
    %1562 = vdwg.mxu0
    %v1563 = vadd.f32 %v403, %v1560
    %1565 = vrot.lane.b32.xlu0 %v1486, 32
    %v1566 = vpop.permute.xlu0 %1565
    %v1567 = vsel %vm41, %v1566, 0
    %1569 = vmatprep.subr.mxu0 0.0
    %1570 = vmatpush1.msra.mxu0 %v182
    %1571 = vmatprep.subr.mxu0 0.0
    %1572 = vmatpush1.msra.mxu0 %v183
    %1573 = vmatprep.subr.mxu0 0.0
    %1574 = vmatpush1.msra.mxu0 0.0
    %1575 = vmatprep.subr.mxu0 0.0
    %1576 = vmatpush1.msra.mxu0 0.0
    %1577 = vmatprep.subr.mxu0 0.0
    %1578 = vmatpush1.msra.mxu0 0.0
    %1579 = vmatprep.subr.mxu0 0.0
    %1580 = vmatpush1.msra.mxu0 0.0
    %1581 = vmatprep.subr.mxu0 0.0
    %1582 = vmatpush1.msra.mxu0 0.0
    %1583 = vmatprep.subr.mxu0 0.0
    %1584 = vmatpush1.msra.mxu0 0.0
    %1585 = vmatprep.subr.mxu0 0.0
    %1586 = vmatpush1.msra.mxu0 0.0
    %1587 = vmatprep.subr.mxu0 0.0
    %1588 = vmatpush1.msra.mxu0 0.0
    %1589 = vmatprep.subr.mxu0 0.0
    %1590 = vmatpush1.msra.mxu0 0.0
    %1591 = vmatprep.subr.mxu0 0.0
    %1592 = vmatpush1.msra.mxu0 0.0
    %1593 = vmatprep.subr.mxu0 0.0
    %1594 = vmatpush1.msra.mxu0 0.0
    %1595 = vmatprep.subr.mxu0 0.0
    %1596 = vmatpush1.msra.mxu0 0.0
    %1597 = vmatprep.subr.mxu0 0.0
    %1598 = vmatpush1.msra.mxu0 0.0
    %1599 = vmatprep.subr.mxu0 0.0
    %1600 = vmatpush1.msra.mxu0 0.0
    %1601 = vmatprep.subr.mxu0 0.0
    %1602 = vmatpush1.msra.mxu0 0.0
    %1603 = vmatprep.subr.mxu0 0.0
    %1604 = vmatpush1.msra.mxu0 0.0
    %1605 = vmatprep.subr.mxu0 0.0
    %1606 = vmatpush1.msra.mxu0 0.0
    %1607 = vmatprep.subr.mxu0 0.0
    %1608 = vmatpush1.msra.mxu0 0.0
    %1609 = vmatprep.subr.mxu0 0.0
    %1610 = vmatpush1.msra.mxu0 0.0
    %1611 = vmatprep.subr.mxu0 0.0
    %1612 = vmatpush1.msra.mxu0 0.0
    %1613 = vmatprep.subr.mxu0 0.0
    %1614 = vmatpush1.msra.mxu0 0.0
    %1615 = vmatprep.subr.mxu0 0.0
    %1616 = vmatpush1.msra.mxu0 0.0
    %1617 = vmatprep.subr.mxu0 0.0
    %1618 = vmatpush1.msra.mxu0 0.0
    %1619 = vmatprep.subr.mxu0 0.0
    %1620 = vmatpush1.msra.mxu0 0.0
    %1621 = vmatprep.subr.mxu0 0.0
    %1622 = vmatpush1.msra.mxu0 0.0
    %1623 = vmatprep.subr.mxu0 0.0
    %1624 = vmatpush1.msra.mxu0 0.0
    %1625 = vmatprep.subr.mxu0 0.0
    %1626 = vmatpush1.msra.mxu0 0.0
    %1627 = vmatprep.subr.mxu0 0.0
    %1628 = vmatpush1.msra.mxu0 0.0
    %1629 = vmatprep.subr.mxu0 0.0
    %1630 = vmatpush1.msra.mxu0 0.0
    %1631 = vmatprep.subr.mxu0 0.0
    %1632 = vmatpush1.msra.mxu0 0.0
    %1633 = vmatprep.mubr.f32.mxu0 0.0
    %1634 = vmatmul.mubr.f32.gmra.mrb[0].mxu0 %v1567
    %v1635 = vpop.f32.mrb[0].mxu0
    %v1636 = vadd.f32 0.0, %v1635
    %v1637 = vpop.f32.mrb[0].mxu0
    %1638 = vdwg.mxu0
    %1640 = vrot.lane.b32.xlu0 %v1636, 64
    %v1641 = vpop.permute.xlu0 %1640
    %v1643 = vadd.f32 %v401, %v1641
    %v1644 = vxor.u32 %v1563, 2147483648
    %v1645 = vmul.f32 %v1644, 1.442695
    %v1646 = vpow.pop %v1645
    %v1647 = vadd.f32 %v1646, 1.0
    %v1648 = vrcp.pop %v1647
    %v1649 = vmul.f32 1.0, %v1648
    %v1650 = vtanh.pop %v1563
    %v1651 = vmul.f32 %v1649, %v1461
    %1653 = vrot.lane.b32.xlu0 %v1650, 80
    %v1654 = vpop.permute.xlu0 %1653
    %v1656 = vmul.f32 %v1649, %v1654
    %1658 = vrot.lane.b32.xlu0 %v1656, 16
    %v1659 = vpop.permute.xlu0 %1658
    %v1661 = vadd.f32 %v1651, %v1659
    %v1662 = vtanh.pop %v1661
    %1664 = vrot.lane.b32.xlu0 %v1662, 16
    %v1665 = vpop.permute.xlu0 %1664
    %v1667 = vmul.f32 %v1649, %v1665
    %v1668 = vsel %vm415, %v1667, %v1460
    %v1669 = vsel %vm415, %v1661, %v1461
    %v1670 = vxor.u32 %v1643, 2147483648
    %v1671 = vmul.f32 %v1670, 1.442695
    %v1672 = vpow.pop %v1671
    %v1673 = vadd.f32 %v1672, 1.0
    %v1674 = vrcp.pop %v1673
    %v1675 = vmul.f32 1.0, %v1674
    %v1676 = vtanh.pop %v1643
    %v1677 = vmul.f32 %v1675, %v1487
    %1679 = vrot.lane.b32.xlu0 %v1676, 80
    %v1680 = vpop.permute.xlu0 %1679
    %v1682 = vmul.f32 %v1675, %v1680
    %1684 = vrot.lane.b32.xlu0 %v1682, 16
    %v1685 = vpop.permute.xlu0 %1684
    %v1687 = vadd.f32 %v1677, %v1685
    %v1688 = vtanh.pop %v1687
    %1690 = vrot.lane.b32.xlu0 %v1688, 16
    %v1691 = vpop.permute.xlu0 %1690
    %v1693 = vmul.f32 %v1675, %v1691
    %v1694 = vsel %vm409, %v1693, %v1486
    %v1695 = vsel %vm409, %v1687, %v1487
    %1697 = vrot.lane.b32.xlu0 %v1668, 96
    %v1698 = vpop.permute.xlu0 %1697
    %v1699 = vsel %vm41, %v1698, 0
    %1701 = vmatprep.subr.mxu0 0.0
    %1702 = vmatpush1.msra.mxu0 %v180
    %1703 = vmatprep.subr.mxu0 0.0
    %1704 = vmatpush1.msra.mxu0 %v181
    %1705 = vmatprep.subr.mxu0 0.0
    %1706 = vmatpush1.msra.mxu0 0.0
    %1707 = vmatprep.subr.mxu0 0.0
    %1708 = vmatpush1.msra.mxu0 0.0
    %1709 = vmatprep.subr.mxu0 0.0
    %1710 = vmatpush1.msra.mxu0 0.0
    %1711 = vmatprep.subr.mxu0 0.0
    %1712 = vmatpush1.msra.mxu0 0.0
    %1713 = vmatprep.subr.mxu0 0.0
    %1714 = vmatpush1.msra.mxu0 0.0
    %1715 = vmatprep.subr.mxu0 0.0
    %1716 = vmatpush1.msra.mxu0 0.0
    %1717 = vmatprep.subr.mxu0 0.0
    %1718 = vmatpush1.msra.mxu0 0.0
    %1719 = vmatprep.subr.mxu0 0.0
    %1720 = vmatpush1.msra.mxu0 0.0
    %1721 = vmatprep.subr.mxu0 0.0
    %1722 = vmatpush1.msra.mxu0 0.0
    %1723 = vmatprep.subr.mxu0 0.0
    %1724 = vmatpush1.msra.mxu0 0.0
    %1725 = vmatprep.subr.mxu0 0.0
    %1726 = vmatpush1.msra.mxu0 0.0
    %1727 = vmatprep.subr.mxu0 0.0
    %1728 = vmatpush1.msra.mxu0 0.0
    %1729 = vmatprep.subr.mxu0 0.0
    %1730 = vmatpush1.msra.mxu0 0.0
    %1731 = vmatprep.subr.mxu0 0.0
    %1732 = vmatpush1.msra.mxu0 0.0
    %1733 = vmatprep.subr.mxu0 0.0
    %1734 = vmatpush1.msra.mxu0 0.0
    %1735 = vmatprep.subr.mxu0 0.0
    %1736 = vmatpush1.msra.mxu0 0.0
    %1737 = vmatprep.subr.mxu0 0.0
    %1738 = vmatpush1.msra.mxu0 0.0
    %1739 = vmatprep.subr.mxu0 0.0
    %1740 = vmatpush1.msra.mxu0 0.0
    %1741 = vmatprep.subr.mxu0 0.0
    %1742 = vmatpush1.msra.mxu0 0.0
    %1743 = vmatprep.subr.mxu0 0.0
    %1744 = vmatpush1.msra.mxu0 0.0
    %1745 = vmatprep.subr.mxu0 0.0
    %1746 = vmatpush1.msra.mxu0 0.0
    %1747 = vmatprep.subr.mxu0 0.0
    %1748 = vmatpush1.msra.mxu0 0.0
    %1749 = vmatprep.subr.mxu0 0.0
    %1750 = vmatpush1.msra.mxu0 0.0
    %1751 = vmatprep.subr.mxu0 0.0
    %1752 = vmatpush1.msra.mxu0 0.0
    %1753 = vmatprep.subr.mxu0 0.0
    %1754 = vmatpush1.msra.mxu0 0.0
    %1755 = vmatprep.subr.mxu0 0.0
    %1756 = vmatpush1.msra.mxu0 0.0
    %1757 = vmatprep.subr.mxu0 0.0
    %1758 = vmatpush1.msra.mxu0 0.0
    %1759 = vmatprep.subr.mxu0 0.0
    %1760 = vmatpush1.msra.mxu0 0.0
    %1761 = vmatprep.subr.mxu0 0.0
    %1762 = vmatpush1.msra.mxu0 0.0
    %1763 = vmatprep.subr.mxu0 0.0
    %1764 = vmatpush1.msra.mxu0 0.0
    %1765 = vmatprep.mubr.f32.mxu0 0.0
    %1766 = vmatmul.mubr.f32.gmra.mrb[0].mxu0 %v1699
    %v1767 = vpop.f32.mrb[0].mxu0
    %v1768 = vadd.f32 0.0, %v1767
    %v1769 = vpop.f32.mrb[0].mxu0
    %1770 = vdwg.mxu0
    %v1771 = vadd.f32 %v186, %v1768
    %1773 = vrot.lane.b32.xlu0 %v1694, 32
    %v1774 = vpop.permute.xlu0 %1773
    %v1775 = vsel %vm41, %v1774, 0
    %1777 = vmatprep.subr.mxu0 0.0
    %1778 = vmatpush1.msra.mxu0 %v182
    %1779 = vmatprep.subr.mxu0 0.0
    %1780 = vmatpush1.msra.mxu0 %v183
    %1781 = vmatprep.subr.mxu0 0.0
    %1782 = vmatpush1.msra.mxu0 0.0
    %1783 = vmatprep.subr.mxu0 0.0
    %1784 = vmatpush1.msra.mxu0 0.0
    %1785 = vmatprep.subr.mxu0 0.0
    %1786 = vmatpush1.msra.mxu0 0.0
    %1787 = vmatprep.subr.mxu0 0.0
    %1788 = vmatpush1.msra.mxu0 0.0
    %1789 = vmatprep.subr.mxu0 0.0
    %1790 = vmatpush1.msra.mxu0 0.0
    %1791 = vmatprep.subr.mxu0 0.0
    %1792 = vmatpush1.msra.mxu0 0.0
    %1793 = vmatprep.subr.mxu0 0.0
    %1794 = vmatpush1.msra.mxu0 0.0
    %1795 = vmatprep.subr.mxu0 0.0
    %1796 = vmatpush1.msra.mxu0 0.0
    %1797 = vmatprep.subr.mxu0 0.0
    %1798 = vmatpush1.msra.mxu0 0.0
    %1799 = vmatprep.subr.mxu0 0.0
    %1800 = vmatpush1.msra.mxu0 0.0
    %1801 = vmatprep.subr.mxu0 0.0
    %1802 = vmatpush1.msra.mxu0 0.0
    %1803 = vmatprep.subr.mxu0 0.0
    %1804 = vmatpush1.msra.mxu0 0.0
    %1805 = vmatprep.subr.mxu0 0.0
    %1806 = vmatpush1.msra.mxu0 0.0
    %1807 = vmatprep.subr.mxu0 0.0
    %1808 = vmatpush1.msra.mxu0 0.0
    %1809 = vmatprep.subr.mxu0 0.0
    %1810 = vmatpush1.msra.mxu0 0.0
    %1811 = vmatprep.subr.mxu0 0.0
    %1812 = vmatpush1.msra.mxu0 0.0
    %1813 = vmatprep.subr.mxu0 0.0
    %1814 = vmatpush1.msra.mxu0 0.0
    %1815 = vmatprep.subr.mxu0 0.0
    %1816 = vmatpush1.msra.mxu0 0.0
    %1817 = vmatprep.subr.mxu0 0.0
    %1818 = vmatpush1.msra.mxu0 0.0
    %1819 = vmatprep.subr.mxu0 0.0
    %1820 = vmatpush1.msra.mxu0 0.0
    %1821 = vmatprep.subr.mxu0 0.0
    %1822 = vmatpush1.msra.mxu0 0.0
    %1823 = vmatprep.subr.mxu0 0.0
    %1824 = vmatpush1.msra.mxu0 0.0
    %1825 = vmatprep.subr.mxu0 0.0
    %1826 = vmatpush1.msra.mxu0 0.0
    %1827 = vmatprep.subr.mxu0 0.0
    %1828 = vmatpush1.msra.mxu0 0.0
    %1829 = vmatprep.subr.mxu0 0.0
    %1830 = vmatpush1.msra.mxu0 0.0
    %1831 = vmatprep.subr.mxu0 0.0
    %1832 = vmatpush1.msra.mxu0 0.0
    %1833 = vmatprep.subr.mxu0 0.0
    %1834 = vmatpush1.msra.mxu0 0.0
    %1835 = vmatprep.subr.mxu0 0.0
    %1836 = vmatpush1.msra.mxu0 0.0
    %1837 = vmatprep.subr.mxu0 0.0
    %1838 = vmatpush1.msra.mxu0 0.0
    %1839 = vmatprep.subr.mxu0 0.0
    %1840 = vmatpush1.msra.mxu0 0.0
    %1841 = vmatprep.mubr.f32.mxu0 0.0
    %1842 = vmatmul.mubr.f32.gmra.mrb[0].mxu0 %v1775
    %v1843 = vpop.f32.mrb[0].mxu0
    %v1844 = vadd.f32 0.0, %v1843
    %v1845 = vpop.f32.mrb[0].mxu0
    %1846 = vdwg.mxu0
    %1848 = vrot.lane.b32.xlu0 %v1844, 64
    %v1849 = vpop.permute.xlu0 %1848
    %v1851 = vadd.f32 %v184, %v1849
    %v1852 = vxor.u32 %v1771, 2147483648
    %v1853 = vmul.f32 %v1852, 1.442695
    %v1854 = vpow.pop %v1853
    %v1855 = vadd.f32 %v1854, 1.0
    %v1856 = vrcp.pop %v1855
    %v1857 = vmul.f32 1.0, %v1856
    %v1858 = vtanh.pop %v1771
    %v1859 = vmul.f32 %v1857, %v1669
    %1861 = vrot.lane.b32.xlu0 %v1858, 80
    %v1862 = vpop.permute.xlu0 %1861
    %v1864 = vmul.f32 %v1857, %v1862
    %1866 = vrot.lane.b32.xlu0 %v1864, 16
    %v1867 = vpop.permute.xlu0 %1866
    %v1869 = vadd.f32 %v1859, %v1867
    %v1870 = vtanh.pop %v1869
    %1872 = vrot.lane.b32.xlu0 %v1870, 16
    %v1873 = vpop.permute.xlu0 %1872
    %v1875 = vmul.f32 %v1857, %v1873
    %v1876 = vsel %vm198, %v1875, %v1668
    %v1877 = vxor.u32 %v1851, 2147483648
    %v1878 = vmul.f32 %v1877, 1.442695
    %v1879 = vpow.pop %v1878
    %v1880 = vadd.f32 %v1879, 1.0
    %v1881 = vrcp.pop %v1880
    %v1882 = vmul.f32 1.0, %v1881
    %v1883 = vtanh.pop %v1851
    %v1884 = vmul.f32 %v1882, %v1695
    %1886 = vrot.lane.b32.xlu0 %v1883, 80
    %v1887 = vpop.permute.xlu0 %1886
    %v1889 = vmul.f32 %v1882, %v1887
    %1891 = vrot.lane.b32.xlu0 %v1889, 16
    %v1892 = vpop.permute.xlu0 %1891
    %v1894 = vadd.f32 %v1884, %v1892
    %v1895 = vtanh.pop %v1894
    %1897 = vrot.lane.b32.xlu0 %v1895, 16
    %v1898 = vpop.permute.xlu0 %1897
    %v1900 = vmul.f32 %v1882, %v1898
    %v1901 = vsel %vm192, %v1900, %v1694
    %1903 = vrot.lane.b32.xlu0 %v1876, 96
    %v1904 = vpop.permute.xlu0 %1903
    %1906 = vst.msk [vmem:[#allocation3] sm:$0xff] %vm41, %v1904
    %1908 = vrot.lane.b32.xlu0 %v1901, 48
    %v1909 = vpop.permute.xlu0 %1908
    %vm1911 = vcmask 261248
    %1912 = vst.msk [vmem:[#allocation3] sm:$0xff] %vm1911, %v1909
    // Predicated region
    $region26: #{char_lstm_forward.1} parent=1 // pred_check
      _
    $region27: #{char_lstm_forward.1} parent=1 // pred_check_branch
      %1914 = sbr.rel (0) target = $region29
    $region28: #{char_lstm_forward.1} parent=1 // pred_region
      %s1916 = ssub.s32 128, 128
      %1917 = vsyncadd [#allocation4], %s1916
      %s1919 = sshll.u32 [#allocation3], 4
      %s1920 = int_to_ptr.vmem [resolvable:$true] %s1919
      %1922 = dma.vmem_to_hbm [thread:$0]  %s1920, 128, %s6, [#allocation4]
    $region29: #{char_lstm_forward.1} parent=1 // pred_fallthru
      _
    // Predicated region
    $region30: #{char_lstm_forward.1} parent=1 // pred_check
      _
    $region31: #{char_lstm_forward.1} parent=1 // pred_check_branch
      %1924 = sbr.rel (0) target = $region33
    $region32: #{char_lstm_forward.1} parent=1 // pred_region
      %1925 = dma.done [#allocation4], 128
    $region33: #{char_lstm_forward.1} parent=1 // pred_fallthru
      _
    %1926 = vsyncpa [#allocation4], 1

</llo_original>
